<compile_context>
chip_gen: v6e
topology: v6e:2x2x1
jax: 0.10.0
libtpu: 0.0.40
codegen_flags: <defaults>
</compile_context>

<pallas_src>
import functools

import numpy as np
import jax
import jax.numpy as jnp
from jax.experimental import pallas as pl
from jax.experimental.pallas import tpu as pltpu

# ---- model hyper-parameters (biLSTM_embed) ----
VOCAB = 100          # vocab_size
HIDDEN = 32          # hidden_dim (embedding width / LSTM layer-0 input width)
ZDIM = 16            # z_dim      (LSTM hidden size per direction)
NUM_LAYERS = 2       # self.num_layers
NUM_DIRS = 2         # bidirectional


def _bilstm_kernel(x_ref, wx0_ref, bx0_ref, wh0_ref, wx1_ref, bx1_ref, wh1_ref,
                   out_ref, xg_ref, y_ref, *, T, Bb, H):
    H2 = 2 * H            # concat(fwd, bwd) hidden width
    G2 = 8 * H            # both directions' gates, interleaved per gate group

    # Static lane mask (hoisted once): within each 2H-wide gate group, the
    # first H lanes belong to the forward direction, the last H to backward.
    lane = jax.lax.broadcasted_iota(jnp.int32, (Bb, G2), 1)
    fwd_lane = (lane % H2) < H

    def run_layer(x_bf16, wx_ref, bx_ref, wh_ref):
        # Hoisted, lane-dense input + bias projection for ALL time steps and
        # BOTH directions in one bf16 MXU matmul: (T*Bb, in) @ (in, 8H=128).
        xg_ref[...] = (jnp.dot(x_bf16, wx_ref[...],
                               preferred_element_type=jnp.float32)
                       + bx_ref[...])

        wh = wh_ref[...]                                  # (2H, 8H) bf16, resident
        h_cat = jnp.zeros((Bb, H2), jnp.float32)          # [h_fwd | h_bwd]
        c_cat = jnp.zeros((Bb, H2), jnp.float32)          # [c_fwd | c_bwd]

        # Sequential recurrence.  T is small -> static unroll with static
        # (zero-cost) slice offsets; only h_cat/c_cat are carried across
        # iterations, per-step outputs go straight to VMEM scratch.
        # (For large T, switch to lax.fori_loop(..., unroll=True) + pl.ds.)
        for s in range(T):
            tf = s                  # forward-direction time index
            tb = T - 1 - s          # backward-direction time index
            # fused fwd+bwd hidden matmul (block-diagonal wh), 128 output lanes
            hg = jnp.dot(h_cat.astype(jnp.bfloat16), wh,
                         preferred_element_type=jnp.float32)      # (Bb, 8H)
            # forward gate lanes come from time tf, backward lanes from tb;
            # both loads are independent of h_cat (off the critical chain).
            gx = jnp.where(fwd_lane,
                           xg_ref[tf * Bb:(tf + 1) * Bb, :],
                           xg_ref[tb * Bb:(tb + 1) * Bb, :])
            gates = gx + hg
            i = jax.nn.sigmoid(gates[:, 0 * H2:1 * H2])
            f = jax.nn.sigmoid(gates[:, 1 * H2:2 * H2])
            g = jnp.tanh(gates[:, 2 * H2:3 * H2])
            o = jax.nn.sigmoid(gates[:, 3 * H2:4 * H2])
            c_cat = f * c_cat + i * g
            h_cat = o * jnp.tanh(c_cat)
            # per-time outputs: fwd hidden belongs to time tf, bwd to time tb
            y_ref[tf * Bb:(tf + 1) * Bb, :H] = h_cat[:, :H]
            y_ref[tb * Bb:(tb + 1) * Bb, H:] = h_cat[:, H:]

    # ---- layer 0 ---- (input: embedded token slab, bf16)
    run_layer(x_ref[0], wx0_ref, bx0_ref, wh0_ref)

    # ---- layer 1 ---- (input: full layer-0 output slab; its xg is computed
    # before the recurrence overwrites y_ref with layer-1 outputs)
    y0_bf16 = y_ref[...].astype(jnp.bfloat16)
    run_layer(y0_bf16, wx1_ref, bx1_ref, wh1_ref)

    # lstm_out[:, -1, :] == [fwd h at t=T-1 | bwd h at t=T-1] == y rows of T-1
    out_ref[...] = y_ref[(T - 1) * Bb:T * Bb, :]


def _pack_weights(params):
    """One-time repack of PyTorch-layout LSTM weights for the kernel.

    Column layout (8H lanes), direction-interleaved per gate group:
        [i_f i_b | f_f f_b | g_f g_b | o_f o_b]
    so the recurrence carry is a single (Bb, 2H) h_cat and the fwd/bwd hidden
    matmul is one block-diagonal (2H, 8H) matrix.
    """
    H = ZDIM
    packed = []
    for layer in range(NUM_LAYERS):
        w_ih_f, w_hh_f, b_ih_f, b_hh_f = params["lstm"][layer][0]
        w_ih_b, w_hh_b, b_ih_b, b_hh_b = params["lstm"][layer][1]
        wx_cols, bx_cols = [], []
        wh = jnp.zeros((2 * H, 8 * H), jnp.float32)
        for k in range(4):                                   # gate order i,f,g,o
            sl = slice(k * H, (k + 1) * H)
            wx_cols += [w_ih_f[sl, :].T, w_ih_b[sl, :].T]
            bx_cols += [b_ih_f[sl] + b_hh_f[sl], b_ih_b[sl] + b_hh_b[sl]]
            wh = wh.at[:H, 2 * k * H:(2 * k + 1) * H].set(w_hh_f[sl, :].T)
            wh = wh.at[H:, (2 * k + 1) * H:(2 * k + 2) * H].set(w_hh_b[sl, :].T)
        wx = jnp.concatenate(wx_cols, axis=1).astype(jnp.bfloat16)   # (in, 8H)
        bx = jnp.concatenate(bx_cols)[None, :].astype(jnp.float32)   # (1, 8H)
        packed += [wx, bx, wh.astype(jnp.bfloat16)]
    return packed


def _pick_bb(B, T, E, H, budget_bytes=8 * 2**20):
    """Largest batch block that fits the VMEM budget; prefer nb >= 2 (v7x)."""
    def per_block_bytes(bb):
        return (2 * T * bb * E * 2          # double-buffered bf16 input block
                + T * bb * 8 * H * 4        # xg scratch (f32)
                + T * bb * 2 * H * 4        # y scratch (f32)
                + 2 * bb * 2 * H * 4)       # double-buffered output block
    B8 = ((B + 7) // 8) * 8
    cands = [c for c in (256, 128, 64, 32, 16, 8)
             if c <= B8 and per_block_bytes(c) <= budget_bytes]
    if not cands:
        cands = [8]
    # prefer nb >= 2 so the "parallel" grid axis can shard across v7x's 2 TCs,
    # as long as the blocks stay reasonably large (>= 64 rows).
    pref = [c for c in cands if c >= 64 and B8 >= 2 * c]
    Bb = pref[0] if pref else cands[0]
    B_pad = ((B8 + Bb - 1) // Bb) * Bb
    return Bb, B_pad


def bilstm_embed(tokens, params):
    """tokens: (B, T) int32 ids. Returns (B, 2*ZDIM) float32 == lstm_out[:, -1, :]."""
    B, T = tokens.shape
    E = HIDDEN
    H = ZDIM
    G2 = 8 * H

    # TODO(synk): the nn.Embedding gather is data dependent; it stays as XLA
    # glue (an in-kernel version would need scalar-prefetched ids + per-row
    # manual DMA gather).
    x_emb = jnp.take(params["emb"], tokens, axis=0).astype(jnp.float32)   # (B,T,E)

    Bb, B_pad = _pick_bb(B, T, E, H)
    nb = B_pad // Bb
    if B_pad != B:
        x_emb = jnp.concatenate(
            [x_emb, jnp.zeros((B_pad - B, T, E), jnp.float32)], axis=0)

    # Time-major (T*Bb, E) bf16 slab per block: one big input-projection matmul,
    # contiguous 8-aligned per-time-step row slices, half the HBM read bytes.
    x_blk = (x_emb.reshape(nb, Bb, T, E).transpose(0, 2, 1, 3)
             .reshape(nb, T * Bb, E).astype(jnp.bfloat16))

    wx0, bx0, wh0, wx1, bx1, wh1 = _pack_weights(params)
    weight_args = (wx0, bx0, wh0, wx1, bx1, wh1)

    kernel = functools.partial(_bilstm_kernel, T=T, Bb=Bb, H=H)

    def full_spec(a):
        nd = a.ndim
        return pl.BlockSpec(a.shape, lambda b, _nd=nd: (0,) * _nd)

    weight_bytes = sum(int(np.prod(w.shape)) * w.dtype.itemsize
                       for w in weight_args)
    # explicit VMEM budget per grid step (review item): blocks + scratch + weights
    vmem_est = (2 * T * Bb * E * 2 + T * Bb * G2 * 4 + T * Bb * 2 * H * 4
                + 2 * Bb * 2 * H * 4 + weight_bytes)
    vmem_limit = int(min(max(4 * vmem_est, 16 * 2**20), 32 * 2**20))

    flops = (2 * B_pad * T * E * G2                       # layer-0 input proj
             + 2 * B_pad * T * (2 * H) * G2               # layer-1 input proj
             + NUM_LAYERS * 2 * B_pad * T * (2 * H) * G2)  # recurrences
    transc = NUM_LAYERS * B_pad * T * 5 * 2 * H
    bytes_acc = (int(x_blk.size) * 2 + B_pad * 2 * H * 4 + weight_bytes)

    out = pl.pallas_call(
        kernel,
        grid=(nb,),
        in_specs=[pl.BlockSpec((1, T * Bb, E), lambda b: (b, 0, 0))]
                 + [full_spec(w) for w in weight_args],
        out_specs=pl.BlockSpec((Bb, 2 * H), lambda b: (b, 0)),
        out_shape=jax.ShapeDtypeStruct((B_pad, 2 * H), jnp.float32),
        scratch_shapes=[pltpu.VMEM((T * Bb, G2), jnp.float32),     # xg slab
                        pltpu.VMEM((T * Bb, 2 * H), jnp.float32)],  # y slab
        compiler_params=pltpu.CompilerParams(
            dimension_semantics=("parallel",),
            vmem_limit_bytes=vmem_limit),
        cost_estimate=pl.CostEstimate(flops=flops, transcendentals=transc,
                                      bytes_accessed=bytes_acc),
    )(x_blk, *weight_args)
    return out[:B]


def init_params(key):
    """PyTorch-like init: Embedding ~ N(0,1); LSTM ~ U(-1/sqrt(H), 1/sqrt(H))."""
    keys = iter(jax.random.split(key, 1 + NUM_LAYERS * NUM_DIRS * 4))
    p = {"emb": jax.random.normal(next(keys), (VOCAB, HIDDEN), jnp.float32)}
    bound = 1.0 / np.sqrt(ZDIM)
    lstm = []
    for layer in range(NUM_LAYERS):
        in_dim = HIDDEN if layer == 0 else 2 * ZDIM
        dirs = []
        for _d in range(NUM_DIRS):
            w_ih = jax.random.uniform(next(keys), (4 * ZDIM, in_dim),
                                      jnp.float32, -bound, bound)
            w_hh = jax.random.uniform(next(keys), (4 * ZDIM, ZDIM),
                                      jnp.float32, -bound, bound)
            b_ih = jax.random.uniform(next(keys), (4 * ZDIM,),
                                      jnp.float32, -bound, bound)
            b_hh = jax.random.uniform(next(keys), (4 * ZDIM,),
                                      jnp.float32, -bound, bound)
            dirs.append((w_ih, w_hh, b_ih, b_hh))
        lstm.append(dirs)
    p["lstm"] = lstm
    return p


def reference(tokens, params):
    """Pure-JAX reference of the PyTorch biLSTM_embed forward (for validation)."""
    B, T = tokens.shape
    H = ZDIM
    x = jnp.take(params["emb"], tokens, axis=0).astype(jnp.float32)

    def run_dir(xs, w_ih, w_hh, b_ih, b_hh, reverse):
        h = jnp.zeros((B, H), jnp.float32)
        c = jnp.zeros((B, H), jnp.float32)
        outs = [None] * T
        order = range(T - 1, -1, -1) if reverse else range(T)
        for t in order:
            g = xs[:, t] @ w_ih.T + b_ih + h @ w_hh.T + b_hh
            i = jax.nn.sigmoid(g[:, :H])
            f = jax.nn.sigmoid(g[:, H:2 * H])
            gg = jnp.tanh(g[:, 2 * H:3 * H])
            o = jax.nn.sigmoid(g[:, 3 * H:])
            c = f * c + i * gg
            h = o * jnp.tanh(c)
            outs[t] = h
        return outs

    for layer in range(NUM_LAYERS):
        wf, whf, bif, bhf = params["lstm"][layer][0]
        wb, whb, bib, bhb = params["lstm"][layer][1]
        of = run_dir(x, wf, whf, bif, bhf, reverse=False)
        ob = run_dir(x, wb, whb, bib, bhb, reverse=True)
        x = jnp.stack([jnp.concatenate([of[t], ob[t]], axis=-1)
                       for t in range(T)], axis=1)
    return x[:, -1, :]


if __name__ == "__main__":
    key = jax.random.PRNGKey(0)
    pkey, xkey = jax.random.split(key)
    params = init_params(pkey)

    B, T = 2, 8
    tokens = jax.random.randint(xkey, (B, T), 0, VOCAB, dtype=jnp.int32)

    out = jax.block_until_ready(bilstm_embed(tokens, params))

    with jax.default_matmul_precision("highest"):
        ref = jax.block_until_ready(reference(tokens, params))

    np.testing.assert_allclose(np.asarray(out), np.asarray(ref), rtol=2e-2, atol=2e-2)
    assert out.shape == (B, 2 * ZDIM)
    print("KERNEL_OK")
</pallas_src>

<mosaic_0001>
module attributes {stable_mosaic.version = 11 : i64} {
  func.func @_bilstm_kernel(%arg0: i32, %arg1: memref<1x64x32xbf16, #tpu.memory_space<vmem>>, %arg2: memref<32x128xbf16, #tpu.memory_space<vmem>>, %arg3: memref<1x128xf32, #tpu.memory_space<vmem>>, %arg4: memref<32x128xbf16, #tpu.memory_space<vmem>>, %arg5: memref<32x128xbf16, #tpu.memory_space<vmem>>, %arg6: memref<1x128xf32, #tpu.memory_space<vmem>>, %arg7: memref<32x128xbf16, #tpu.memory_space<vmem>>, %arg8: memref<8x32xf32, #tpu.memory_space<vmem>>, %arg9: memref<64x128xf32, #tpu.memory_space<vmem>>, %arg10: memref<64x32xf32, #tpu.memory_space<vmem>>) attributes {dimension_semantics = [#tpu.dimension_semantics<parallel>], iteration_bounds = array<i64: 1>, scalar_prefetch = 0 : i64, scratch_operands = 2 : i64, tpu.core_type = #tpu.core_type<tc>, window_params = [{transform_indices = @transform_0, window_bounds = array<i64: 1, 64, 32>}, {pipeline_mode = #tpu.pipeline_mode<synchronous>, transform_indices = @transform_1, window_bounds = array<i64: 32, 128>}, {pipeline_mode = #tpu.pipeline_mode<synchronous>, transform_indices = @transform_2, window_bounds = array<i64: 1, 128>}, {pipeline_mode = #tpu.pipeline_mode<synchronous>, transform_indices = @transform_3, window_bounds = array<i64: 32, 128>}, {pipeline_mode = #tpu.pipeline_mode<synchronous>, transform_indices = @transform_4, window_bounds = array<i64: 32, 128>}, {pipeline_mode = #tpu.pipeline_mode<synchronous>, transform_indices = @transform_5, window_bounds = array<i64: 1, 128>}, {pipeline_mode = #tpu.pipeline_mode<synchronous>, transform_indices = @transform_6, window_bounds = array<i64: 32, 128>}, {transform_indices = @transform_7, window_bounds = array<i64: 8, 32>}]} {
    %0 = tpu.iota {dimensions = array<i32: 1>} : vector<8x128xi32>
    %c32_i32 = arith.constant 32 : i32
    %c0_i32 = arith.constant 0 : i32
    %1 = arith.cmpi eq, %c32_i32, %c0_i32 : i32
    %c1_i32 = arith.constant 1 : i32
    %2 = arith.select %1, %c1_i32, %c32_i32 : i32
    %3 = vector.broadcast %2 : i32 to vector<8x128xi32>
    %4 = arith.remsi %0, %3 : vector<8x128xi32>
    %c0_i32_0 = arith.constant 0 : i32
    %5 = vector.broadcast %c0_i32_0 : i32 to vector<8x128xi32>
    %6 = arith.cmpi ne, %4, %5 : vector<8x128xi32>
    %c0_i32_1 = arith.constant 0 : i32
    %7 = vector.broadcast %c0_i32_1 : i32 to vector<8x128xi32>
    %8 = arith.cmpi slt, %4, %7 : vector<8x128xi32>
    %c0_i32_2 = arith.constant 0 : i32
    %9 = arith.cmpi slt, %2, %c0_i32_2 : i32
    %10 = vector.broadcast %9 : i1 to vector<8x128xi1>
    %11 = vector.broadcast %10 : vector<8x128xi1> to vector<8x128xi1>
    %12 = arith.xori %8, %11 : vector<8x128xi1>
    %13 = arith.andi %12, %6 : vector<8x128xi1>
    %14 = vector.broadcast %2 : i32 to vector<8x128xi32>
    %15 = arith.addi %4, %14 : vector<8x128xi32>
    %16 = arith.select %13, %15, %4 : vector<8x128xi1>, vector<8x128xi32>
    %c16_i32 = arith.constant 16 : i32
    %17 = vector.broadcast %c16_i32 : i32 to vector<8x128xi32>
    %18 = arith.cmpi slt, %16, %17 : vector<8x128xi32>
    %c0 = arith.constant 0 : index
    %c0_3 = arith.constant 0 : index
    %c0_4 = arith.constant 0 : index
    %19 = vector.load %arg1[%c0, %c0_3, %c0_4] : memref<1x64x32xbf16, #tpu.memory_space<vmem>>, vector<1x64x32xbf16>
    %20 = vector.shape_cast %19 : vector<1x64x32xbf16> to vector<64x32xbf16>
    %c0_5 = arith.constant 0 : index
    %c0_6 = arith.constant 0 : index
    %21 = vector.load %arg2[%c0_5, %c0_6] : memref<32x128xbf16, #tpu.memory_space<vmem>>, vector<32x128xbf16>
    %cst = arith.constant dense<0.000000e+00> : vector<64x128xf32>
    %22 = tpu.matmul %20, %21, %cst {dimension_numbers = #tpu.dot_dimension_numbers<[1], [0], [0], [1], [0, 0, 1, 1], [], []>} : vector<64x32xbf16>, vector<32x128xbf16>, vector<64x128xf32> -> vector<64x128xf32>
    %c0_7 = arith.constant 0 : index
    %c0_8 = arith.constant 0 : index
    %23 = vector.load %arg3[%c0_7, %c0_8] : memref<1x128xf32, #tpu.memory_space<vmem>>, vector<1x128xf32>
    %24 = vector.broadcast %23 : vector<1x128xf32> to vector<64x128xf32>
    %25 = arith.addf %22, %24 : vector<64x128xf32>
    %c0_9 = arith.constant 0 : index
    %c0_10 = arith.constant 0 : index
    %26 = vector.load %arg9[%c0_9, %c0_10] : memref<64x128xf32, #tpu.memory_space<vmem>>, vector<64x128xf32>
    tpu.vector_store %arg9[%c0_9, %c0_10], %25 {strides = array<i32>} : memref<64x128xf32, #tpu.memory_space<vmem>>, vector<64x128xf32>,
    %c0_11 = arith.constant 0 : index
    %c0_12 = arith.constant 0 : index
    %27 = vector.load %arg4[%c0_11, %c0_12] : memref<32x128xbf16, #tpu.memory_space<vmem>>, vector<32x128xbf16>
    %cst_13 = arith.constant 0.000000e+00 : f32
    %28 = vector.broadcast %cst_13 : f32 to vector<8x32xf32>
    %cst_14 = arith.constant 0.000000e+00 : f32
    %29 = vector.broadcast %cst_14 : f32 to vector<8x32xf32>
    %30 = arith.truncf %28 : vector<8x32xf32> to vector<8x32xbf16>
    %cst_15 = arith.constant dense<0.000000e+00> : vector<8x128xf32>
    %31 = tpu.matmul %30, %27, %cst_15 {dimension_numbers = #tpu.dot_dimension_numbers<[1], [0], [0], [1], [0, 0, 1, 1], [], []>} : vector<8x32xbf16>, vector<32x128xbf16>, vector<8x128xf32> -> vector<8x128xf32>
    %c0_16 = arith.constant 0 : index
    %c0_17 = arith.constant 0 : index
    %32 = vector.load %arg9[%c0_16, %c0_17] : memref<64x128xf32, #tpu.memory_space<vmem>>, vector<8x128xf32>
    %c56 = arith.constant 56 : index
    %c0_18 = arith.constant 0 : index
    %33 = vector.load %arg9[%c56, %c0_18] : memref<64x128xf32, #tpu.memory_space<vmem>>, vector<8x128xf32>
    %34 = arith.select %18, %32, %33 : vector<8x128xi1>, vector<8x128xf32>
    %35 = arith.addf %34, %31 : vector<8x128xf32>
    %36 = vector.extract_strided_slice %35 {offsets = [0, 0], sizes = [8, 32], strides = [1, 1]} : vector<8x128xf32> to vector<8x32xf32>
    %37 = arith.negf %36 : vector<8x32xf32>
    %38 = math.exp %37 : vector<8x32xf32>
    %cst_19 = arith.constant 1.000000e+00 : f32
    %39 = vector.broadcast %cst_19 : f32 to vector<8x32xf32>
    %40 = arith.addf %39, %38 : vector<8x32xf32>
    %41 = arith.divf %39, %40 : vector<8x32xf32>
    %42 = vector.extract_strided_slice %35 {offsets = [0, 32], sizes = [8, 32], strides = [1, 1]} : vector<8x128xf32> to vector<8x32xf32>
    %43 = arith.negf %42 : vector<8x32xf32>
    %44 = math.exp %43 : vector<8x32xf32>
    %cst_20 = arith.constant 1.000000e+00 : f32
    %45 = vector.broadcast %cst_20 : f32 to vector<8x32xf32>
    %46 = arith.addf %45, %44 : vector<8x32xf32>
    %47 = arith.divf %45, %46 : vector<8x32xf32>
    %48 = vector.extract_strided_slice %35 {offsets = [0, 64], sizes = [8, 32], strides = [1, 1]} : vector<8x128xf32> to vector<8x32xf32>
    %49 = math.tanh %48 : vector<8x32xf32>
    %50 = vector.extract_strided_slice %35 {offsets = [0, 96], sizes = [8, 32], strides = [1, 1]} : vector<8x128xf32> to vector<8x32xf32>
    %51 = arith.negf %50 : vector<8x32xf32>
    %52 = math.exp %51 : vector<8x32xf32>
    %cst_21 = arith.constant 1.000000e+00 : f32
    %53 = vector.broadcast %cst_21 : f32 to vector<8x32xf32>
    %54 = arith.addf %53, %52 : vector<8x32xf32>
    %55 = arith.divf %53, %54 : vector<8x32xf32>
    %56 = arith.mulf %47, %29 : vector<8x32xf32>
    %57 = arith.mulf %41, %49 : vector<8x32xf32>
    %58 = arith.addf %56, %57 : vector<8x32xf32>
    %59 = math.tanh %58 : vector<8x32xf32>
    %60 = arith.mulf %55, %59 : vector<8x32xf32>
    %61 = vector.extract_strided_slice %60 {offsets = [0, 0], sizes = [8, 16], strides = [1, 1]} : vector<8x32xf32> to vector<8x16xf32>
    %c0_22 = arith.constant 0 : index
    %c0_23 = arith.constant 0 : index
    %62 = vector.load %arg10[%c0_22, %c0_23] : memref<64x32xf32, #tpu.memory_space<vmem>>, vector<8x16xf32>
    tpu.vector_store %arg10[%c0_22, %c0_23], %61 {strides = array<i32>} : memref<64x32xf32, #tpu.memory_space<vmem>>, vector<8x16xf32>,
    %63 = vector.extract_strided_slice %60 {offsets = [0, 16], sizes = [8, 16], strides = [1, 1]} : vector<8x32xf32> to vector<8x16xf32>
    %c56_24 = arith.constant 56 : index
    %c16 = arith.constant 16 : index
    %64 = vector.load %arg10[%c56_24, %c16] : memref<64x32xf32, #tpu.memory_space<vmem>>, vector<8x16xf32>
    tpu.vector_store %arg10[%c56_24, %c16], %63 {strides = array<i32>} : memref<64x32xf32, #tpu.memory_space<vmem>>, vector<8x16xf32>,
    %65 = arith.truncf %60 : vector<8x32xf32> to vector<8x32xbf16>
    %cst_25 = arith.constant dense<0.000000e+00> : vector<8x128xf32>
    %66 = tpu.matmul %65, %27, %cst_25 {dimension_numbers = #tpu.dot_dimension_numbers<[1], [0], [0], [1], [0, 0, 1, 1], [], []>} : vector<8x32xbf16>, vector<32x128xbf16>, vector<8x128xf32> -> vector<8x128xf32>
    %c8 = arith.constant 8 : index
    %c0_26 = arith.constant 0 : index
    %67 = vector.load %arg9[%c8, %c0_26] : memref<64x128xf32, #tpu.memory_space<vmem>>, vector<8x128xf32>
    %c48 = arith.constant 48 : index
    %c0_27 = arith.constant 0 : index
    %68 = vector.load %arg9[%c48, %c0_27] : memref<64x128xf32, #tpu.memory_space<vmem>>, vector<8x128xf32>
    %69 = arith.select %18, %67, %68 : vector<8x128xi1>, vector<8x128xf32>
    %70 = arith.addf %69, %66 : vector<8x128xf32>
    %71 = vector.extract_strided_slice %70 {offsets = [0, 0], sizes = [8, 32], strides = [1, 1]} : vector<8x128xf32> to vector<8x32xf32>
    %72 = arith.negf %71 : vector<8x32xf32>
    %73 = math.exp %72 : vector<8x32xf32>
    %cst_28 = arith.constant 1.000000e+00 : f32
    %74 = vector.broadcast %cst_28 : f32 to vector<8x32xf32>
    %75 = arith.addf %74, %73 : vector<8x32xf32>
    %76 = arith.divf %74, %75 : vector<8x32xf32>
    %77 = vector.extract_strided_slice %70 {offsets = [0, 32], sizes = [8, 32], strides = [1, 1]} : vector<8x128xf32> to vector<8x32xf32>
    %78 = arith.negf %77 : vector<8x32xf32>
    %79 = math.exp %78 : vector<8x32xf32>
    %cst_29 = arith.constant 1.000000e+00 : f32
    %80 = vector.broadcast %cst_29 : f32 to vector<8x32xf32>
    %81 = arith.addf %80, %79 : vector<8x32xf32>
    %82 = arith.divf %80, %81 : vector<8x32xf32>
    %83 = vector.extract_strided_slice %70 {offsets = [0, 64], sizes = [8, 32], strides = [1, 1]} : vector<8x128xf32> to vector<8x32xf32>
    %84 = math.tanh %83 : vector<8x32xf32>
    %85 = vector.extract_strided_slice %70 {offsets = [0, 96], sizes = [8, 32], strides = [1, 1]} : vector<8x128xf32> to vector<8x32xf32>
    %86 = arith.negf %85 : vector<8x32xf32>
    %87 = math.exp %86 : vector<8x32xf32>
    %cst_30 = arith.constant 1.000000e+00 : f32
    %88 = vector.broadcast %cst_30 : f32 to vector<8x32xf32>
    %89 = arith.addf %88, %87 : vector<8x32xf32>
    %90 = arith.divf %88, %89 : vector<8x32xf32>
    %91 = arith.mulf %82, %58 : vector<8x32xf32>
    %92 = arith.mulf %76, %84 : vector<8x32xf32>
    %93 = arith.addf %91, %92 : vector<8x32xf32>
    %94 = math.tanh %93 : vector<8x32xf32>
    %95 = arith.mulf %90, %94 : vector<8x32xf32>
    %96 = vector.extract_strided_slice %95 {offsets = [0, 0], sizes = [8, 16], strides = [1, 1]} : vector<8x32xf32> to vector<8x16xf32>
    %c8_31 = arith.constant 8 : index
    %c0_32 = arith.constant 0 : index
    %97 = vector.load %arg10[%c8_31, %c0_32] : memref<64x32xf32, #tpu.memory_space<vmem>>, vector<8x16xf32>
    tpu.vector_store %arg10[%c8_31, %c0_32], %96 {strides = array<i32>} : memref<64x32xf32, #tpu.memory_space<vmem>>, vector<8x16xf32>,
    %98 = vector.extract_strided_slice %95 {offsets = [0, 16], sizes = [8, 16], strides = [1, 1]} : vector<8x32xf32> to vector<8x16xf32>
    %c48_33 = arith.constant 48 : index
    %c16_34 = arith.constant 16 : index
    %99 = vector.load %arg10[%c48_33, %c16_34] : memref<64x32xf32, #tpu.memory_space<vmem>>, vector<8x16xf32>
    tpu.vector_store %arg10[%c48_33, %c16_34], %98 {strides = array<i32>} : memref<64x32xf32, #tpu.memory_space<vmem>>, vector<8x16xf32>,
    %100 = arith.truncf %95 : vector<8x32xf32> to vector<8x32xbf16>
    %cst_35 = arith.constant dense<0.000000e+00> : vector<8x128xf32>
    %101 = tpu.matmul %100, %27, %cst_35 {dimension_numbers = #tpu.dot_dimension_numbers<[1], [0], [0], [1], [0, 0, 1, 1], [], []>} : vector<8x32xbf16>, vector<32x128xbf16>, vector<8x128xf32> -> vector<8x128xf32>
    %c16_36 = arith.constant 16 : index
    %c0_37 = arith.constant 0 : index
    %102 = vector.load %arg9[%c16_36, %c0_37] : memref<64x128xf32, #tpu.memory_space<vmem>>, vector<8x128xf32>
    %c40 = arith.constant 40 : index
    %c0_38 = arith.constant 0 : index
    %103 = vector.load %arg9[%c40, %c0_38] : memref<64x128xf32, #tpu.memory_space<vmem>>, vector<8x128xf32>
    %104 = arith.select %18, %102, %103 : vector<8x128xi1>, vector<8x128xf32>
    %105 = arith.addf %104, %101 : vector<8x128xf32>
    %106 = vector.extract_strided_slice %105 {offsets = [0, 0], sizes = [8, 32], strides = [1, 1]} : vector<8x128xf32> to vector<8x32xf32>
    %107 = arith.negf %106 : vector<8x32xf32>
    %108 = math.exp %107 : vector<8x32xf32>
    %cst_39 = arith.constant 1.000000e+00 : f32
    %109 = vector.broadcast %cst_39 : f32 to vector<8x32xf32>
    %110 = arith.addf %109, %108 : vector<8x32xf32>
    %111 = arith.divf %109, %110 : vector<8x32xf32>
    %112 = vector.extract_strided_slice %105 {offsets = [0, 32], sizes = [8, 32], strides = [1, 1]} : vector<8x128xf32> to vector<8x32xf32>
    %113 = arith.negf %112 : vector<8x32xf32>
    %114 = math.exp %113 : vector<8x32xf32>
    %cst_40 = arith.constant 1.000000e+00 : f32
    %115 = vector.broadcast %cst_40 : f32 to vector<8x32xf32>
    %116 = arith.addf %115, %114 : vector<8x32xf32>
    %117 = arith.divf %115, %116 : vector<8x32xf32>
    %118 = vector.extract_strided_slice %105 {offsets = [0, 64], sizes = [8, 32], strides = [1, 1]} : vector<8x128xf32> to vector<8x32xf32>
    %119 = math.tanh %118 : vector<8x32xf32>
    %120 = vector.extract_strided_slice %105 {offsets = [0, 96], sizes = [8, 32], strides = [1, 1]} : vector<8x128xf32> to vector<8x32xf32>
    %121 = arith.negf %120 : vector<8x32xf32>
    %122 = math.exp %121 : vector<8x32xf32>
    %cst_41 = arith.constant 1.000000e+00 : f32
    %123 = vector.broadcast %cst_41 : f32 to vector<8x32xf32>
    %124 = arith.addf %123, %122 : vector<8x32xf32>
    %125 = arith.divf %123, %124 : vector<8x32xf32>
    %126 = arith.mulf %117, %93 : vector<8x32xf32>
    %127 = arith.mulf %111, %119 : vector<8x32xf32>
    %128 = arith.addf %126, %127 : vector<8x32xf32>
    %129 = math.tanh %128 : vector<8x32xf32>
    %130 = arith.mulf %125, %129 : vector<8x32xf32>
    %131 = vector.extract_strided_slice %130 {offsets = [0, 0], sizes = [8, 16], strides = [1, 1]} : vector<8x32xf32> to vector<8x16xf32>
    %c16_42 = arith.constant 16 : index
    %c0_43 = arith.constant 0 : index
    %132 = vector.load %arg10[%c16_42, %c0_43] : memref<64x32xf32, #tpu.memory_space<vmem>>, vector<8x16xf32>
    tpu.vector_store %arg10[%c16_42, %c0_43], %131 {strides = array<i32>} : memref<64x32xf32, #tpu.memory_space<vmem>>, vector<8x16xf32>,
    %133 = vector.extract_strided_slice %130 {offsets = [0, 16], sizes = [8, 16], strides = [1, 1]} : vector<8x32xf32> to vector<8x16xf32>
    %c40_44 = arith.constant 40 : index
    %c16_45 = arith.constant 16 : index
    %134 = vector.load %arg10[%c40_44, %c16_45] : memref<64x32xf32, #tpu.memory_space<vmem>>, vector<8x16xf32>
    tpu.vector_store %arg10[%c40_44, %c16_45], %133 {strides = array<i32>} : memref<64x32xf32, #tpu.memory_space<vmem>>, vector<8x16xf32>,
    %135 = arith.truncf %130 : vector<8x32xf32> to vector<8x32xbf16>
    %cst_46 = arith.constant dense<0.000000e+00> : vector<8x128xf32>
    %136 = tpu.matmul %135, %27, %cst_46 {dimension_numbers = #tpu.dot_dimension_numbers<[1], [0], [0], [1], [0, 0, 1, 1], [], []>} : vector<8x32xbf16>, vector<32x128xbf16>, vector<8x128xf32> -> vector<8x128xf32>
    %c24 = arith.constant 24 : index
    %c0_47 = arith.constant 0 : index
    %137 = vector.load %arg9[%c24, %c0_47] : memref<64x128xf32, #tpu.memory_space<vmem>>, vector<8x128xf32>
    %c32 = arith.constant 32 : index
    %c0_48 = arith.constant 0 : index
    %138 = vector.load %arg9[%c32, %c0_48] : memref<64x128xf32, #tpu.memory_space<vmem>>, vector<8x128xf32>
    %139 = arith.select %18, %137, %138 : vector<8x128xi1>, vector<8x128xf32>
    %140 = arith.addf %139, %136 : vector<8x128xf32>
    %141 = vector.extract_strided_slice %140 {offsets = [0, 0], sizes = [8, 32], strides = [1, 1]} : vector<8x128xf32> to vector<8x32xf32>
    %142 = arith.negf %141 : vector<8x32xf32>
    %143 = math.exp %142 : vector<8x32xf32>
    %cst_49 = arith.constant 1.000000e+00 : f32
    %144 = vector.broadcast %cst_49 : f32 to vector<8x32xf32>
    %145 = arith.addf %144, %143 : vector<8x32xf32>
    %146 = arith.divf %144, %145 : vector<8x32xf32>
    %147 = vector.extract_strided_slice %140 {offsets = [0, 32], sizes = [8, 32], strides = [1, 1]} : vector<8x128xf32> to vector<8x32xf32>
    %148 = arith.negf %147 : vector<8x32xf32>
    %149 = math.exp %148 : vector<8x32xf32>
    %cst_50 = arith.constant 1.000000e+00 : f32
    %150 = vector.broadcast %cst_50 : f32 to vector<8x32xf32>
    %151 = arith.addf %150, %149 : vector<8x32xf32>
    %152 = arith.divf %150, %151 : vector<8x32xf32>
    %153 = vector.extract_strided_slice %140 {offsets = [0, 64], sizes = [8, 32], strides = [1, 1]} : vector<8x128xf32> to vector<8x32xf32>
    %154 = math.tanh %153 : vector<8x32xf32>
    %155 = vector.extract_strided_slice %140 {offsets = [0, 96], sizes = [8, 32], strides = [1, 1]} : vector<8x128xf32> to vector<8x32xf32>
    %156 = arith.negf %155 : vector<8x32xf32>
    %157 = math.exp %156 : vector<8x32xf32>
    %cst_51 = arith.constant 1.000000e+00 : f32
    %158 = vector.broadcast %cst_51 : f32 to vector<8x32xf32>
    %159 = arith.addf %158, %157 : vector<8x32xf32>
    %160 = arith.divf %158, %159 : vector<8x32xf32>
    %161 = arith.mulf %152, %128 : vector<8x32xf32>
    %162 = arith.mulf %146, %154 : vector<8x32xf32>
    %163 = arith.addf %161, %162 : vector<8x32xf32>
    %164 = math.tanh %163 : vector<8x32xf32>
    %165 = arith.mulf %160, %164 : vector<8x32xf32>
    %166 = vector.extract_strided_slice %165 {offsets = [0, 0], sizes = [8, 16], strides = [1, 1]} : vector<8x32xf32> to vector<8x16xf32>
    %c24_52 = arith.constant 24 : index
    %c0_53 = arith.constant 0 : index
    %167 = vector.load %arg10[%c24_52, %c0_53] : memref<64x32xf32, #tpu.memory_space<vmem>>, vector<8x16xf32>
    tpu.vector_store %arg10[%c24_52, %c0_53], %166 {strides = array<i32>} : memref<64x32xf32, #tpu.memory_space<vmem>>, vector<8x16xf32>,
    %168 = vector.extract_strided_slice %165 {offsets = [0, 16], sizes = [8, 16], strides = [1, 1]} : vector<8x32xf32> to vector<8x16xf32>
    %c32_54 = arith.constant 32 : index
    %c16_55 = arith.constant 16 : index
    %169 = vector.load %arg10[%c32_54, %c16_55] : memref<64x32xf32, #tpu.memory_space<vmem>>, vector<8x16xf32>
    tpu.vector_store %arg10[%c32_54, %c16_55], %168 {strides = array<i32>} : memref<64x32xf32, #tpu.memory_space<vmem>>, vector<8x16xf32>,
    %170 = arith.truncf %165 : vector<8x32xf32> to vector<8x32xbf16>
    %cst_56 = arith.constant dense<0.000000e+00> : vector<8x128xf32>
    %171 = tpu.matmul %170, %27, %cst_56 {dimension_numbers = #tpu.dot_dimension_numbers<[1], [0], [0], [1], [0, 0, 1, 1], [], []>} : vector<8x32xbf16>, vector<32x128xbf16>, vector<8x128xf32> -> vector<8x128xf32>
    %c32_57 = arith.constant 32 : index
    %c0_58 = arith.constant 0 : index
    %172 = vector.load %arg9[%c32_57, %c0_58] : memref<64x128xf32, #tpu.memory_space<vmem>>, vector<8x128xf32>
    %c24_59 = arith.constant 24 : index
    %c0_60 = arith.constant 0 : index
    %173 = vector.load %arg9[%c24_59, %c0_60] : memref<64x128xf32, #tpu.memory_space<vmem>>, vector<8x128xf32>
    %174 = arith.select %18, %172, %173 : vector<8x128xi1>, vector<8x128xf32>
    %175 = arith.addf %174, %171 : vector<8x128xf32>
    %176 = vector.extract_strided_slice %175 {offsets = [0, 0], sizes = [8, 32], strides = [1, 1]} : vector<8x128xf32> to vector<8x32xf32>
    %177 = arith.negf %176 : vector<8x32xf32>
    %178 = math.exp %177 : vector<8x32xf32>
    %cst_61 = arith.constant 1.000000e+00 : f32
    %179 = vector.broadcast %cst_61 : f32 to vector<8x32xf32>
    %180 = arith.addf %179, %178 : vector<8x32xf32>
    %181 = arith.divf %179, %180 : vector<8x32xf32>
    %182 = vector.extract_strided_slice %175 {offsets = [0, 32], sizes = [8, 32], strides = [1, 1]} : vector<8x128xf32> to vector<8x32xf32>
    %183 = arith.negf %182 : vector<8x32xf32>
    %184 = math.exp %183 : vector<8x32xf32>
    %cst_62 = arith.constant 1.000000e+00 : f32
    %185 = vector.broadcast %cst_62 : f32 to vector<8x32xf32>
    %186 = arith.addf %185, %184 : vector<8x32xf32>
    %187 = arith.divf %185, %186 : vector<8x32xf32>
    %188 = vector.extract_strided_slice %175 {offsets = [0, 64], sizes = [8, 32], strides = [1, 1]} : vector<8x128xf32> to vector<8x32xf32>
    %189 = math.tanh %188 : vector<8x32xf32>
    %190 = vector.extract_strided_slice %175 {offsets = [0, 96], sizes = [8, 32], strides = [1, 1]} : vector<8x128xf32> to vector<8x32xf32>
    %191 = arith.negf %190 : vector<8x32xf32>
    %192 = math.exp %191 : vector<8x32xf32>
    %cst_63 = arith.constant 1.000000e+00 : f32
    %193 = vector.broadcast %cst_63 : f32 to vector<8x32xf32>
    %194 = arith.addf %193, %192 : vector<8x32xf32>
    %195 = arith.divf %193, %194 : vector<8x32xf32>
    %196 = arith.mulf %187, %163 : vector<8x32xf32>
    %197 = arith.mulf %181, %189 : vector<8x32xf32>
    %198 = arith.addf %196, %197 : vector<8x32xf32>
    %199 = math.tanh %198 : vector<8x32xf32>
    %200 = arith.mulf %195, %199 : vector<8x32xf32>
    %201 = vector.extract_strided_slice %200 {offsets = [0, 0], sizes = [8, 16], strides = [1, 1]} : vector<8x32xf32> to vector<8x16xf32>
    %c32_64 = arith.constant 32 : index
    %c0_65 = arith.constant 0 : index
    %202 = vector.load %arg10[%c32_64, %c0_65] : memref<64x32xf32, #tpu.memory_space<vmem>>, vector<8x16xf32>
    tpu.vector_store %arg10[%c32_64, %c0_65], %201 {strides = array<i32>} : memref<64x32xf32, #tpu.memory_space<vmem>>, vector<8x16xf32>,
    %203 = vector.extract_strided_slice %200 {offsets = [0, 16], sizes = [8, 16], strides = [1, 1]} : vector<8x32xf32> to vector<8x16xf32>
    %c24_66 = arith.constant 24 : index
    %c16_67 = arith.constant 16 : index
    %204 = vector.load %arg10[%c24_66, %c16_67] : memref<64x32xf32, #tpu.memory_space<vmem>>, vector<8x16xf32>
    tpu.vector_store %arg10[%c24_66, %c16_67], %203 {strides = array<i32>} : memref<64x32xf32, #tpu.memory_space<vmem>>, vector<8x16xf32>,
    %205 = arith.truncf %200 : vector<8x32xf32> to vector<8x32xbf16>
    %cst_68 = arith.constant dense<0.000000e+00> : vector<8x128xf32>
    %206 = tpu.matmul %205, %27, %cst_68 {dimension_numbers = #tpu.dot_dimension_numbers<[1], [0], [0], [1], [0, 0, 1, 1], [], []>} : vector<8x32xbf16>, vector<32x128xbf16>, vector<8x128xf32> -> vector<8x128xf32>
    %c40_69 = arith.constant 40 : index
    %c0_70 = arith.constant 0 : index
    %207 = vector.load %arg9[%c40_69, %c0_70] : memref<64x128xf32, #tpu.memory_space<vmem>>, vector<8x128xf32>
    %c16_71 = arith.constant 16 : index
    %c0_72 = arith.constant 0 : index
    %208 = vector.load %arg9[%c16_71, %c0_72] : memref<64x128xf32, #tpu.memory_space<vmem>>, vector<8x128xf32>
    %209 = arith.select %18, %207, %208 : vector<8x128xi1>, vector<8x128xf32>
    %210 = arith.addf %209, %206 : vector<8x128xf32>
    %211 = vector.extract_strided_slice %210 {offsets = [0, 0], sizes = [8, 32], strides = [1, 1]} : vector<8x128xf32> to vector<8x32xf32>
    %212 = arith.negf %211 : vector<8x32xf32>
    %213 = math.exp %212 : vector<8x32xf32>
    %cst_73 = arith.constant 1.000000e+00 : f32
    %214 = vector.broadcast %cst_73 : f32 to vector<8x32xf32>
    %215 = arith.addf %214, %213 : vector<8x32xf32>
    %216 = arith.divf %214, %215 : vector<8x32xf32>
    %217 = vector.extract_strided_slice %210 {offsets = [0, 32], sizes = [8, 32], strides = [1, 1]} : vector<8x128xf32> to vector<8x32xf32>
    %218 = arith.negf %217 : vector<8x32xf32>
    %219 = math.exp %218 : vector<8x32xf32>
    %cst_74 = arith.constant 1.000000e+00 : f32
    %220 = vector.broadcast %cst_74 : f32 to vector<8x32xf32>
    %221 = arith.addf %220, %219 : vector<8x32xf32>
    %222 = arith.divf %220, %221 : vector<8x32xf32>
    %223 = vector.extract_strided_slice %210 {offsets = [0, 64], sizes = [8, 32], strides = [1, 1]} : vector<8x128xf32> to vector<8x32xf32>
    %224 = math.tanh %223 : vector<8x32xf32>
    %225 = vector.extract_strided_slice %210 {offsets = [0, 96], sizes = [8, 32], strides = [1, 1]} : vector<8x128xf32> to vector<8x32xf32>
    %226 = arith.negf %225 : vector<8x32xf32>
    %227 = math.exp %226 : vector<8x32xf32>
    %cst_75 = arith.constant 1.000000e+00 : f32
    %228 = vector.broadcast %cst_75 : f32 to vector<8x32xf32>
    %229 = arith.addf %228, %227 : vector<8x32xf32>
    %230 = arith.divf %228, %229 : vector<8x32xf32>
    %231 = arith.mulf %222, %198 : vector<8x32xf32>
    %232 = arith.mulf %216, %224 : vector<8x32xf32>
    %233 = arith.addf %231, %232 : vector<8x32xf32>
    %234 = math.tanh %233 : vector<8x32xf32>
    %235 = arith.mulf %230, %234 : vector<8x32xf32>
    %236 = vector.extract_strided_slice %235 {offsets = [0, 0], sizes = [8, 16], strides = [1, 1]} : vector<8x32xf32> to vector<8x16xf32>
    %c40_76 = arith.constant 40 : index
    %c0_77 = arith.constant 0 : index
    %237 = vector.load %arg10[%c40_76, %c0_77] : memref<64x32xf32, #tpu.memory_space<vmem>>, vector<8x16xf32>
    tpu.vector_store %arg10[%c40_76, %c0_77], %236 {strides = array<i32>} : memref<64x32xf32, #tpu.memory_space<vmem>>, vector<8x16xf32>,
    %238 = vector.extract_strided_slice %235 {offsets = [0, 16], sizes = [8, 16], strides = [1, 1]} : vector<8x32xf32> to vector<8x16xf32>
    %c16_78 = arith.constant 16 : index
    %c16_79 = arith.constant 16 : index
    %239 = vector.load %arg10[%c16_78, %c16_79] : memref<64x32xf32, #tpu.memory_space<vmem>>, vector<8x16xf32>
    tpu.vector_store %arg10[%c16_78, %c16_79], %238 {strides = array<i32>} : memref<64x32xf32, #tpu.memory_space<vmem>>, vector<8x16xf32>,
    %240 = arith.truncf %235 : vector<8x32xf32> to vector<8x32xbf16>
    %cst_80 = arith.constant dense<0.000000e+00> : vector<8x128xf32>
    %241 = tpu.matmul %240, %27, %cst_80 {dimension_numbers = #tpu.dot_dimension_numbers<[1], [0], [0], [1], [0, 0, 1, 1], [], []>} : vector<8x32xbf16>, vector<32x128xbf16>, vector<8x128xf32> -> vector<8x128xf32>
    %c48_81 = arith.constant 48 : index
    %c0_82 = arith.constant 0 : index
    %242 = vector.load %arg9[%c48_81, %c0_82] : memref<64x128xf32, #tpu.memory_space<vmem>>, vector<8x128xf32>
    %c8_83 = arith.constant 8 : index
    %c0_84 = arith.constant 0 : index
    %243 = vector.load %arg9[%c8_83, %c0_84] : memref<64x128xf32, #tpu.memory_space<vmem>>, vector<8x128xf32>
    %244 = arith.select %18, %242, %243 : vector<8x128xi1>, vector<8x128xf32>
    %245 = arith.addf %244, %241 : vector<8x128xf32>
    %246 = vector.extract_strided_slice %245 {offsets = [0, 0], sizes = [8, 32], strides = [1, 1]} : vector<8x128xf32> to vector<8x32xf32>
    %247 = arith.negf %246 : vector<8x32xf32>
    %248 = math.exp %247 : vector<8x32xf32>
    %cst_85 = arith.constant 1.000000e+00 : f32
    %249 = vector.broadcast %cst_85 : f32 to vector<8x32xf32>
    %250 = arith.addf %249, %248 : vector<8x32xf32>
    %251 = arith.divf %249, %250 : vector<8x32xf32>
    %252 = vector.extract_strided_slice %245 {offsets = [0, 32], sizes = [8, 32], strides = [1, 1]} : vector<8x128xf32> to vector<8x32xf32>
    %253 = arith.negf %252 : vector<8x32xf32>
    %254 = math.exp %253 : vector<8x32xf32>
    %cst_86 = arith.constant 1.000000e+00 : f32
    %255 = vector.broadcast %cst_86 : f32 to vector<8x32xf32>
    %256 = arith.addf %255, %254 : vector<8x32xf32>
    %257 = arith.divf %255, %256 : vector<8x32xf32>
    %258 = vector.extract_strided_slice %245 {offsets = [0, 64], sizes = [8, 32], strides = [1, 1]} : vector<8x128xf32> to vector<8x32xf32>
    %259 = math.tanh %258 : vector<8x32xf32>
    %260 = vector.extract_strided_slice %245 {offsets = [0, 96], sizes = [8, 32], strides = [1, 1]} : vector<8x128xf32> to vector<8x32xf32>
    %261 = arith.negf %260 : vector<8x32xf32>
    %262 = math.exp %261 : vector<8x32xf32>
    %cst_87 = arith.constant 1.000000e+00 : f32
    %263 = vector.broadcast %cst_87 : f32 to vector<8x32xf32>
    %264 = arith.addf %263, %262 : vector<8x32xf32>
    %265 = arith.divf %263, %264 : vector<8x32xf32>
    %266 = arith.mulf %257, %233 : vector<8x32xf32>
    %267 = arith.mulf %251, %259 : vector<8x32xf32>
    %268 = arith.addf %266, %267 : vector<8x32xf32>
    %269 = math.tanh %268 : vector<8x32xf32>
    %270 = arith.mulf %265, %269 : vector<8x32xf32>
    %271 = vector.extract_strided_slice %270 {offsets = [0, 0], sizes = [8, 16], strides = [1, 1]} : vector<8x32xf32> to vector<8x16xf32>
    %c48_88 = arith.constant 48 : index
    %c0_89 = arith.constant 0 : index
    %272 = vector.load %arg10[%c48_88, %c0_89] : memref<64x32xf32, #tpu.memory_space<vmem>>, vector<8x16xf32>
    tpu.vector_store %arg10[%c48_88, %c0_89], %271 {strides = array<i32>} : memref<64x32xf32, #tpu.memory_space<vmem>>, vector<8x16xf32>,
    %273 = vector.extract_strided_slice %270 {offsets = [0, 16], sizes = [8, 16], strides = [1, 1]} : vector<8x32xf32> to vector<8x16xf32>
    %c8_90 = arith.constant 8 : index
    %c16_91 = arith.constant 16 : index
    %274 = vector.load %arg10[%c8_90, %c16_91] : memref<64x32xf32, #tpu.memory_space<vmem>>, vector<8x16xf32>
    tpu.vector_store %arg10[%c8_90, %c16_91], %273 {strides = array<i32>} : memref<64x32xf32, #tpu.memory_space<vmem>>, vector<8x16xf32>,
    %275 = arith.truncf %270 : vector<8x32xf32> to vector<8x32xbf16>
    %cst_92 = arith.constant dense<0.000000e+00> : vector<8x128xf32>
    %276 = tpu.matmul %275, %27, %cst_92 {dimension_numbers = #tpu.dot_dimension_numbers<[1], [0], [0], [1], [0, 0, 1, 1], [], []>} : vector<8x32xbf16>, vector<32x128xbf16>, vector<8x128xf32> -> vector<8x128xf32>
    %c56_93 = arith.constant 56 : index
    %c0_94 = arith.constant 0 : index
    %277 = vector.load %arg9[%c56_93, %c0_94] : memref<64x128xf32, #tpu.memory_space<vmem>>, vector<8x128xf32>
    %c0_95 = arith.constant 0 : index
    %c0_96 = arith.constant 0 : index
    %278 = vector.load %arg9[%c0_95, %c0_96] : memref<64x128xf32, #tpu.memory_space<vmem>>, vector<8x128xf32>
    %279 = arith.select %18, %277, %278 : vector<8x128xi1>, vector<8x128xf32>
    %280 = arith.addf %279, %276 : vector<8x128xf32>
    %281 = vector.extract_strided_slice %280 {offsets = [0, 0], sizes = [8, 32], strides = [1, 1]} : vector<8x128xf32> to vector<8x32xf32>
    %282 = arith.negf %281 : vector<8x32xf32>
    %283 = math.exp %282 : vector<8x32xf32>
    %cst_97 = arith.constant 1.000000e+00 : f32
    %284 = vector.broadcast %cst_97 : f32 to vector<8x32xf32>
    %285 = arith.addf %284, %283 : vector<8x32xf32>
    %286 = arith.divf %284, %285 : vector<8x32xf32>
    %287 = vector.extract_strided_slice %280 {offsets = [0, 32], sizes = [8, 32], strides = [1, 1]} : vector<8x128xf32> to vector<8x32xf32>
    %288 = arith.negf %287 : vector<8x32xf32>
    %289 = math.exp %288 : vector<8x32xf32>
    %cst_98 = arith.constant 1.000000e+00 : f32
    %290 = vector.broadcast %cst_98 : f32 to vector<8x32xf32>
    %291 = arith.addf %290, %289 : vector<8x32xf32>
    %292 = arith.divf %290, %291 : vector<8x32xf32>
    %293 = vector.extract_strided_slice %280 {offsets = [0, 64], sizes = [8, 32], strides = [1, 1]} : vector<8x128xf32> to vector<8x32xf32>
    %294 = math.tanh %293 : vector<8x32xf32>
    %295 = vector.extract_strided_slice %280 {offsets = [0, 96], sizes = [8, 32], strides = [1, 1]} : vector<8x128xf32> to vector<8x32xf32>
    %296 = arith.negf %295 : vector<8x32xf32>
    %297 = math.exp %296 : vector<8x32xf32>
    %cst_99 = arith.constant 1.000000e+00 : f32
    %298 = vector.broadcast %cst_99 : f32 to vector<8x32xf32>
    %299 = arith.addf %298, %297 : vector<8x32xf32>
    %300 = arith.divf %298, %299 : vector<8x32xf32>
    %301 = arith.mulf %292, %268 : vector<8x32xf32>
    %302 = arith.mulf %286, %294 : vector<8x32xf32>
    %303 = arith.addf %301, %302 : vector<8x32xf32>
    %304 = math.tanh %303 : vector<8x32xf32>
    %305 = arith.mulf %300, %304 : vector<8x32xf32>
    %306 = vector.extract_strided_slice %305 {offsets = [0, 0], sizes = [8, 16], strides = [1, 1]} : vector<8x32xf32> to vector<8x16xf32>
    %c56_100 = arith.constant 56 : index
    %c0_101 = arith.constant 0 : index
    %307 = vector.load %arg10[%c56_100, %c0_101] : memref<64x32xf32, #tpu.memory_space<vmem>>, vector<8x16xf32>
    tpu.vector_store %arg10[%c56_100, %c0_101], %306 {strides = array<i32>} : memref<64x32xf32, #tpu.memory_space<vmem>>, vector<8x16xf32>,
    %308 = vector.extract_strided_slice %305 {offsets = [0, 16], sizes = [8, 16], strides = [1, 1]} : vector<8x32xf32> to vector<8x16xf32>
    %c0_102 = arith.constant 0 : index
    %c16_103 = arith.constant 16 : index
    %309 = vector.load %arg10[%c0_102, %c16_103] : memref<64x32xf32, #tpu.memory_space<vmem>>, vector<8x16xf32>
    tpu.vector_store %arg10[%c0_102, %c16_103], %308 {strides = array<i32>} : memref<64x32xf32, #tpu.memory_space<vmem>>, vector<8x16xf32>,
    %c0_104 = arith.constant 0 : index
    %c0_105 = arith.constant 0 : index
    %310 = vector.load %arg10[%c0_104, %c0_105] : memref<64x32xf32, #tpu.memory_space<vmem>>, vector<64x32xf32>
    %311 = arith.truncf %310 : vector<64x32xf32> to vector<64x32xbf16>
    %c0_106 = arith.constant 0 : index
    %c0_107 = arith.constant 0 : index
    %312 = vector.load %arg5[%c0_106, %c0_107] : memref<32x128xbf16, #tpu.memory_space<vmem>>, vector<32x128xbf16>
    %cst_108 = arith.constant dense<0.000000e+00> : vector<64x128xf32>
    %313 = tpu.matmul %311, %312, %cst_108 {dimension_numbers = #tpu.dot_dimension_numbers<[1], [0], [0], [1], [0, 0, 1, 1], [], []>} : vector<64x32xbf16>, vector<32x128xbf16>, vector<64x128xf32> -> vector<64x128xf32>
    %c0_109 = arith.constant 0 : index
    %c0_110 = arith.constant 0 : index
    %314 = vector.load %arg6[%c0_109, %c0_110] : memref<1x128xf32, #tpu.memory_space<vmem>>, vector<1x128xf32>
    %315 = vector.broadcast %314 : vector<1x128xf32> to vector<64x128xf32>
    %316 = arith.addf %313, %315 : vector<64x128xf32>
    %c0_111 = arith.constant 0 : index
    %c0_112 = arith.constant 0 : index
    %317 = vector.load %arg9[%c0_111, %c0_112] : memref<64x128xf32, #tpu.memory_space<vmem>>, vector<64x128xf32>
    tpu.vector_store %arg9[%c0_111, %c0_112], %316 {strides = array<i32>} : memref<64x128xf32, #tpu.memory_space<vmem>>, vector<64x128xf32>,
    %c0_113 = arith.constant 0 : index
    %c0_114 = arith.constant 0 : index
    %318 = vector.load %arg7[%c0_113, %c0_114] : memref<32x128xbf16, #tpu.memory_space<vmem>>, vector<32x128xbf16>
    %cst_115 = arith.constant 0.000000e+00 : f32
    %319 = vector.broadcast %cst_115 : f32 to vector<8x32xf32>
    %cst_116 = arith.constant 0.000000e+00 : f32
    %320 = vector.broadcast %cst_116 : f32 to vector<8x32xf32>
    %321 = arith.truncf %319 : vector<8x32xf32> to vector<8x32xbf16>
    %cst_117 = arith.constant dense<0.000000e+00> : vector<8x128xf32>
    %322 = tpu.matmul %321, %318, %cst_117 {dimension_numbers = #tpu.dot_dimension_numbers<[1], [0], [0], [1], [0, 0, 1, 1], [], []>} : vector<8x32xbf16>, vector<32x128xbf16>, vector<8x128xf32> -> vector<8x128xf32>
    %c0_118 = arith.constant 0 : index
    %c0_119 = arith.constant 0 : index
    %323 = vector.load %arg9[%c0_118, %c0_119] : memref<64x128xf32, #tpu.memory_space<vmem>>, vector<8x128xf32>
    %c56_120 = arith.constant 56 : index
    %c0_121 = arith.constant 0 : index
    %324 = vector.load %arg9[%c56_120, %c0_121] : memref<64x128xf32, #tpu.memory_space<vmem>>, vector<8x128xf32>
    %325 = arith.select %18, %323, %324 : vector<8x128xi1>, vector<8x128xf32>
    %326 = arith.addf %325, %322 : vector<8x128xf32>
    %327 = vector.extract_strided_slice %326 {offsets = [0, 0], sizes = [8, 32], strides = [1, 1]} : vector<8x128xf32> to vector<8x32xf32>
    %328 = arith.negf %327 : vector<8x32xf32>
    %329 = math.exp %328 : vector<8x32xf32>
    %cst_122 = arith.constant 1.000000e+00 : f32
    %330 = vector.broadcast %cst_122 : f32 to vector<8x32xf32>
    %331 = arith.addf %330, %329 : vector<8x32xf32>
    %332 = arith.divf %330, %331 : vector<8x32xf32>
    %333 = vector.extract_strided_slice %326 {offsets = [0, 32], sizes = [8, 32], strides = [1, 1]} : vector<8x128xf32> to vector<8x32xf32>
    %334 = arith.negf %333 : vector<8x32xf32>
    %335 = math.exp %334 : vector<8x32xf32>
    %cst_123 = arith.constant 1.000000e+00 : f32
    %336 = vector.broadcast %cst_123 : f32 to vector<8x32xf32>
    %337 = arith.addf %336, %335 : vector<8x32xf32>
    %338 = arith.divf %336, %337 : vector<8x32xf32>
    %339 = vector.extract_strided_slice %326 {offsets = [0, 64], sizes = [8, 32], strides = [1, 1]} : vector<8x128xf32> to vector<8x32xf32>
    %340 = math.tanh %339 : vector<8x32xf32>
    %341 = vector.extract_strided_slice %326 {offsets = [0, 96], sizes = [8, 32], strides = [1, 1]} : vector<8x128xf32> to vector<8x32xf32>
    %342 = arith.negf %341 : vector<8x32xf32>
    %343 = math.exp %342 : vector<8x32xf32>
    %cst_124 = arith.constant 1.000000e+00 : f32
    %344 = vector.broadcast %cst_124 : f32 to vector<8x32xf32>
    %345 = arith.addf %344, %343 : vector<8x32xf32>
    %346 = arith.divf %344, %345 : vector<8x32xf32>
    %347 = arith.mulf %338, %320 : vector<8x32xf32>
    %348 = arith.mulf %332, %340 : vector<8x32xf32>
    %349 = arith.addf %347, %348 : vector<8x32xf32>
    %350 = math.tanh %349 : vector<8x32xf32>
    %351 = arith.mulf %346, %350 : vector<8x32xf32>
    %352 = vector.extract_strided_slice %351 {offsets = [0, 0], sizes = [8, 16], strides = [1, 1]} : vector<8x32xf32> to vector<8x16xf32>
    %c0_125 = arith.constant 0 : index
    %c0_126 = arith.constant 0 : index
    %353 = vector.load %arg10[%c0_125, %c0_126] : memref<64x32xf32, #tpu.memory_space<vmem>>, vector<8x16xf32>
    tpu.vector_store %arg10[%c0_125, %c0_126], %352 {strides = array<i32>} : memref<64x32xf32, #tpu.memory_space<vmem>>, vector<8x16xf32>,
    %354 = vector.extract_strided_slice %351 {offsets = [0, 16], sizes = [8, 16], strides = [1, 1]} : vector<8x32xf32> to vector<8x16xf32>
    %c56_127 = arith.constant 56 : index
    %c16_128 = arith.constant 16 : index
    %355 = vector.load %arg10[%c56_127, %c16_128] : memref<64x32xf32, #tpu.memory_space<vmem>>, vector<8x16xf32>
    tpu.vector_store %arg10[%c56_127, %c16_128], %354 {strides = array<i32>} : memref<64x32xf32, #tpu.memory_space<vmem>>, vector<8x16xf32>,
    %356 = arith.truncf %351 : vector<8x32xf32> to vector<8x32xbf16>
    %cst_129 = arith.constant dense<0.000000e+00> : vector<8x128xf32>
    %357 = tpu.matmul %356, %318, %cst_129 {dimension_numbers = #tpu.dot_dimension_numbers<[1], [0], [0], [1], [0, 0, 1, 1], [], []>} : vector<8x32xbf16>, vector<32x128xbf16>, vector<8x128xf32> -> vector<8x128xf32>
    %c8_130 = arith.constant 8 : index
    %c0_131 = arith.constant 0 : index
    %358 = vector.load %arg9[%c8_130, %c0_131] : memref<64x128xf32, #tpu.memory_space<vmem>>, vector<8x128xf32>
    %c48_132 = arith.constant 48 : index
    %c0_133 = arith.constant 0 : index
    %359 = vector.load %arg9[%c48_132, %c0_133] : memref<64x128xf32, #tpu.memory_space<vmem>>, vector<8x128xf32>
    %360 = arith.select %18, %358, %359 : vector<8x128xi1>, vector<8x128xf32>
    %361 = arith.addf %360, %357 : vector<8x128xf32>
    %362 = vector.extract_strided_slice %361 {offsets = [0, 0], sizes = [8, 32], strides = [1, 1]} : vector<8x128xf32> to vector<8x32xf32>
    %363 = arith.negf %362 : vector<8x32xf32>
    %364 = math.exp %363 : vector<8x32xf32>
    %cst_134 = arith.constant 1.000000e+00 : f32
    %365 = vector.broadcast %cst_134 : f32 to vector<8x32xf32>
    %366 = arith.addf %365, %364 : vector<8x32xf32>
    %367 = arith.divf %365, %366 : vector<8x32xf32>
    %368 = vector.extract_strided_slice %361 {offsets = [0, 32], sizes = [8, 32], strides = [1, 1]} : vector<8x128xf32> to vector<8x32xf32>
    %369 = arith.negf %368 : vector<8x32xf32>
    %370 = math.exp %369 : vector<8x32xf32>
    %cst_135 = arith.constant 1.000000e+00 : f32
    %371 = vector.broadcast %cst_135 : f32 to vector<8x32xf32>
    %372 = arith.addf %371, %370 : vector<8x32xf32>
    %373 = arith.divf %371, %372 : vector<8x32xf32>
    %374 = vector.extract_strided_slice %361 {offsets = [0, 64], sizes = [8, 32], strides = [1, 1]} : vector<8x128xf32> to vector<8x32xf32>
    %375 = math.tanh %374 : vector<8x32xf32>
    %376 = vector.extract_strided_slice %361 {offsets = [0, 96], sizes = [8, 32], strides = [1, 1]} : vector<8x128xf32> to vector<8x32xf32>
    %377 = arith.negf %376 : vector<8x32xf32>
    %378 = math.exp %377 : vector<8x32xf32>
    %cst_136 = arith.constant 1.000000e+00 : f32
    %379 = vector.broadcast %cst_136 : f32 to vector<8x32xf32>
    %380 = arith.addf %379, %378 : vector<8x32xf32>
    %381 = arith.divf %379, %380 : vector<8x32xf32>
    %382 = arith.mulf %373, %349 : vector<8x32xf32>
    %383 = arith.mulf %367, %375 : vector<8x32xf32>
    %384 = arith.addf %382, %383 : vector<8x32xf32>
    %385 = math.tanh %384 : vector<8x32xf32>
    %386 = arith.mulf %381, %385 : vector<8x32xf32>
    %387 = vector.extract_strided_slice %386 {offsets = [0, 0], sizes = [8, 16], strides = [1, 1]} : vector<8x32xf32> to vector<8x16xf32>
    %c8_137 = arith.constant 8 : index
    %c0_138 = arith.constant 0 : index
    %388 = vector.load %arg10[%c8_137, %c0_138] : memref<64x32xf32, #tpu.memory_space<vmem>>, vector<8x16xf32>
    tpu.vector_store %arg10[%c8_137, %c0_138], %387 {strides = array<i32>} : memref<64x32xf32, #tpu.memory_space<vmem>>, vector<8x16xf32>,
    %389 = vector.extract_strided_slice %386 {offsets = [0, 16], sizes = [8, 16], strides = [1, 1]} : vector<8x32xf32> to vector<8x16xf32>
    %c48_139 = arith.constant 48 : index
    %c16_140 = arith.constant 16 : index
    %390 = vector.load %arg10[%c48_139, %c16_140] : memref<64x32xf32, #tpu.memory_space<vmem>>, vector<8x16xf32>
    tpu.vector_store %arg10[%c48_139, %c16_140], %389 {strides = array<i32>} : memref<64x32xf32, #tpu.memory_space<vmem>>, vector<8x16xf32>,
    %391 = arith.truncf %386 : vector<8x32xf32> to vector<8x32xbf16>
    %cst_141 = arith.constant dense<0.000000e+00> : vector<8x128xf32>
    %392 = tpu.matmul %391, %318, %cst_141 {dimension_numbers = #tpu.dot_dimension_numbers<[1], [0], [0], [1], [0, 0, 1, 1], [], []>} : vector<8x32xbf16>, vector<32x128xbf16>, vector<8x128xf32> -> vector<8x128xf32>
    %c16_142 = arith.constant 16 : index
    %c0_143 = arith.constant 0 : index
    %393 = vector.load %arg9[%c16_142, %c0_143] : memref<64x128xf32, #tpu.memory_space<vmem>>, vector<8x128xf32>
    %c40_144 = arith.constant 40 : index
    %c0_145 = arith.constant 0 : index
    %394 = vector.load %arg9[%c40_144, %c0_145] : memref<64x128xf32, #tpu.memory_space<vmem>>, vector<8x128xf32>
    %395 = arith.select %18, %393, %394 : vector<8x128xi1>, vector<8x128xf32>
    %396 = arith.addf %395, %392 : vector<8x128xf32>
    %397 = vector.extract_strided_slice %396 {offsets = [0, 0], sizes = [8, 32], strides = [1, 1]} : vector<8x128xf32> to vector<8x32xf32>
    %398 = arith.negf %397 : vector<8x32xf32>
    %399 = math.exp %398 : vector<8x32xf32>
    %cst_146 = arith.constant 1.000000e+00 : f32
    %400 = vector.broadcast %cst_146 : f32 to vector<8x32xf32>
    %401 = arith.addf %400, %399 : vector<8x32xf32>
    %402 = arith.divf %400, %401 : vector<8x32xf32>
    %403 = vector.extract_strided_slice %396 {offsets = [0, 32], sizes = [8, 32], strides = [1, 1]} : vector<8x128xf32> to vector<8x32xf32>
    %404 = arith.negf %403 : vector<8x32xf32>
    %405 = math.exp %404 : vector<8x32xf32>
    %cst_147 = arith.constant 1.000000e+00 : f32
    %406 = vector.broadcast %cst_147 : f32 to vector<8x32xf32>
    %407 = arith.addf %406, %405 : vector<8x32xf32>
    %408 = arith.divf %406, %407 : vector<8x32xf32>
    %409 = vector.extract_strided_slice %396 {offsets = [0, 64], sizes = [8, 32], strides = [1, 1]} : vector<8x128xf32> to vector<8x32xf32>
    %410 = math.tanh %409 : vector<8x32xf32>
    %411 = vector.extract_strided_slice %396 {offsets = [0, 96], sizes = [8, 32], strides = [1, 1]} : vector<8x128xf32> to vector<8x32xf32>
    %412 = arith.negf %411 : vector<8x32xf32>
    %413 = math.exp %412 : vector<8x32xf32>
    %cst_148 = arith.constant 1.000000e+00 : f32
    %414 = vector.broadcast %cst_148 : f32 to vector<8x32xf32>
    %415 = arith.addf %414, %413 : vector<8x32xf32>
    %416 = arith.divf %414, %415 : vector<8x32xf32>
    %417 = arith.mulf %408, %384 : vector<8x32xf32>
    %418 = arith.mulf %402, %410 : vector<8x32xf32>
    %419 = arith.addf %417, %418 : vector<8x32xf32>
    %420 = math.tanh %419 : vector<8x32xf32>
    %421 = arith.mulf %416, %420 : vector<8x32xf32>
    %422 = vector.extract_strided_slice %421 {offsets = [0, 0], sizes = [8, 16], strides = [1, 1]} : vector<8x32xf32> to vector<8x16xf32>
    %c16_149 = arith.constant 16 : index
    %c0_150 = arith.constant 0 : index
    %423 = vector.load %arg10[%c16_149, %c0_150] : memref<64x32xf32, #tpu.memory_space<vmem>>, vector<8x16xf32>
    tpu.vector_store %arg10[%c16_149, %c0_150], %422 {strides = array<i32>} : memref<64x32xf32, #tpu.memory_space<vmem>>, vector<8x16xf32>,
    %424 = vector.extract_strided_slice %421 {offsets = [0, 16], sizes = [8, 16], strides = [1, 1]} : vector<8x32xf32> to vector<8x16xf32>
    %c40_151 = arith.constant 40 : index
    %c16_152 = arith.constant 16 : index
    %425 = vector.load %arg10[%c40_151, %c16_152] : memref<64x32xf32, #tpu.memory_space<vmem>>, vector<8x16xf32>
    tpu.vector_store %arg10[%c40_151, %c16_152], %424 {strides = array<i32>} : memref<64x32xf32, #tpu.memory_space<vmem>>, vector<8x16xf32>,
    %426 = arith.truncf %421 : vector<8x32xf32> to vector<8x32xbf16>
    %cst_153 = arith.constant dense<0.000000e+00> : vector<8x128xf32>
    %427 = tpu.matmul %426, %318, %cst_153 {dimension_numbers = #tpu.dot_dimension_numbers<[1], [0], [0], [1], [0, 0, 1, 1], [], []>} : vector<8x32xbf16>, vector<32x128xbf16>, vector<8x128xf32> -> vector<8x128xf32>
    %c24_154 = arith.constant 24 : index
    %c0_155 = arith.constant 0 : index
    %428 = vector.load %arg9[%c24_154, %c0_155] : memref<64x128xf32, #tpu.memory_space<vmem>>, vector<8x128xf32>
    %c32_156 = arith.constant 32 : index
    %c0_157 = arith.constant 0 : index
    %429 = vector.load %arg9[%c32_156, %c0_157] : memref<64x128xf32, #tpu.memory_space<vmem>>, vector<8x128xf32>
    %430 = arith.select %18, %428, %429 : vector<8x128xi1>, vector<8x128xf32>
    %431 = arith.addf %430, %427 : vector<8x128xf32>
    %432 = vector.extract_strided_slice %431 {offsets = [0, 0], sizes = [8, 32], strides = [1, 1]} : vector<8x128xf32> to vector<8x32xf32>
    %433 = arith.negf %432 : vector<8x32xf32>
    %434 = math.exp %433 : vector<8x32xf32>
    %cst_158 = arith.constant 1.000000e+00 : f32
    %435 = vector.broadcast %cst_158 : f32 to vector<8x32xf32>
    %436 = arith.addf %435, %434 : vector<8x32xf32>
    %437 = arith.divf %435, %436 : vector<8x32xf32>
    %438 = vector.extract_strided_slice %431 {offsets = [0, 32], sizes = [8, 32], strides = [1, 1]} : vector<8x128xf32> to vector<8x32xf32>
    %439 = arith.negf %438 : vector<8x32xf32>
    %440 = math.exp %439 : vector<8x32xf32>
    %cst_159 = arith.constant 1.000000e+00 : f32
    %441 = vector.broadcast %cst_159 : f32 to vector<8x32xf32>
    %442 = arith.addf %441, %440 : vector<8x32xf32>
    %443 = arith.divf %441, %442 : vector<8x32xf32>
    %444 = vector.extract_strided_slice %431 {offsets = [0, 64], sizes = [8, 32], strides = [1, 1]} : vector<8x128xf32> to vector<8x32xf32>
    %445 = math.tanh %444 : vector<8x32xf32>
    %446 = vector.extract_strided_slice %431 {offsets = [0, 96], sizes = [8, 32], strides = [1, 1]} : vector<8x128xf32> to vector<8x32xf32>
    %447 = arith.negf %446 : vector<8x32xf32>
    %448 = math.exp %447 : vector<8x32xf32>
    %cst_160 = arith.constant 1.000000e+00 : f32
    %449 = vector.broadcast %cst_160 : f32 to vector<8x32xf32>
    %450 = arith.addf %449, %448 : vector<8x32xf32>
    %451 = arith.divf %449, %450 : vector<8x32xf32>
    %452 = arith.mulf %443, %419 : vector<8x32xf32>
    %453 = arith.mulf %437, %445 : vector<8x32xf32>
    %454 = arith.addf %452, %453 : vector<8x32xf32>
    %455 = math.tanh %454 : vector<8x32xf32>
    %456 = arith.mulf %451, %455 : vector<8x32xf32>
    %457 = vector.extract_strided_slice %456 {offsets = [0, 0], sizes = [8, 16], strides = [1, 1]} : vector<8x32xf32> to vector<8x16xf32>
    %c24_161 = arith.constant 24 : index
    %c0_162 = arith.constant 0 : index
    %458 = vector.load %arg10[%c24_161, %c0_162] : memref<64x32xf32, #tpu.memory_space<vmem>>, vector<8x16xf32>
    tpu.vector_store %arg10[%c24_161, %c0_162], %457 {strides = array<i32>} : memref<64x32xf32, #tpu.memory_space<vmem>>, vector<8x16xf32>,
    %459 = vector.extract_strided_slice %456 {offsets = [0, 16], sizes = [8, 16], strides = [1, 1]} : vector<8x32xf32> to vector<8x16xf32>
    %c32_163 = arith.constant 32 : index
    %c16_164 = arith.constant 16 : index
    %460 = vector.load %arg10[%c32_163, %c16_164] : memref<64x32xf32, #tpu.memory_space<vmem>>, vector<8x16xf32>
    tpu.vector_store %arg10[%c32_163, %c16_164], %459 {strides = array<i32>} : memref<64x32xf32, #tpu.memory_space<vmem>>, vector<8x16xf32>,
    %461 = arith.truncf %456 : vector<8x32xf32> to vector<8x32xbf16>
    %cst_165 = arith.constant dense<0.000000e+00> : vector<8x128xf32>
    %462 = tpu.matmul %461, %318, %cst_165 {dimension_numbers = #tpu.dot_dimension_numbers<[1], [0], [0], [1], [0, 0, 1, 1], [], []>} : vector<8x32xbf16>, vector<32x128xbf16>, vector<8x128xf32> -> vector<8x128xf32>
    %c32_166 = arith.constant 32 : index
    %c0_167 = arith.constant 0 : index
    %463 = vector.load %arg9[%c32_166, %c0_167] : memref<64x128xf32, #tpu.memory_space<vmem>>, vector<8x128xf32>
    %c24_168 = arith.constant 24 : index
    %c0_169 = arith.constant 0 : index
    %464 = vector.load %arg9[%c24_168, %c0_169] : memref<64x128xf32, #tpu.memory_space<vmem>>, vector<8x128xf32>
    %465 = arith.select %18, %463, %464 : vector<8x128xi1>, vector<8x128xf32>
    %466 = arith.addf %465, %462 : vector<8x128xf32>
    %467 = vector.extract_strided_slice %466 {offsets = [0, 0], sizes = [8, 32], strides = [1, 1]} : vector<8x128xf32> to vector<8x32xf32>
    %468 = arith.negf %467 : vector<8x32xf32>
    %469 = math.exp %468 : vector<8x32xf32>
    %cst_170 = arith.constant 1.000000e+00 : f32
    %470 = vector.broadcast %cst_170 : f32 to vector<8x32xf32>
    %471 = arith.addf %470, %469 : vector<8x32xf32>
    %472 = arith.divf %470, %471 : vector<8x32xf32>
    %473 = vector.extract_strided_slice %466 {offsets = [0, 32], sizes = [8, 32], strides = [1, 1]} : vector<8x128xf32> to vector<8x32xf32>
    %474 = arith.negf %473 : vector<8x32xf32>
    %475 = math.exp %474 : vector<8x32xf32>
    %cst_171 = arith.constant 1.000000e+00 : f32
    %476 = vector.broadcast %cst_171 : f32 to vector<8x32xf32>
    %477 = arith.addf %476, %475 : vector<8x32xf32>
    %478 = arith.divf %476, %477 : vector<8x32xf32>
    %479 = vector.extract_strided_slice %466 {offsets = [0, 64], sizes = [8, 32], strides = [1, 1]} : vector<8x128xf32> to vector<8x32xf32>
    %480 = math.tanh %479 : vector<8x32xf32>
    %481 = vector.extract_strided_slice %466 {offsets = [0, 96], sizes = [8, 32], strides = [1, 1]} : vector<8x128xf32> to vector<8x32xf32>
    %482 = arith.negf %481 : vector<8x32xf32>
    %483 = math.exp %482 : vector<8x32xf32>
    %cst_172 = arith.constant 1.000000e+00 : f32
    %484 = vector.broadcast %cst_172 : f32 to vector<8x32xf32>
    %485 = arith.addf %484, %483 : vector<8x32xf32>
    %486 = arith.divf %484, %485 : vector<8x32xf32>
    %487 = arith.mulf %478, %454 : vector<8x32xf32>
    %488 = arith.mulf %472, %480 : vector<8x32xf32>
    %489 = arith.addf %487, %488 : vector<8x32xf32>
    %490 = math.tanh %489 : vector<8x32xf32>
    %491 = arith.mulf %486, %490 : vector<8x32xf32>
    %492 = vector.extract_strided_slice %491 {offsets = [0, 0], sizes = [8, 16], strides = [1, 1]} : vector<8x32xf32> to vector<8x16xf32>
    %c32_173 = arith.constant 32 : index
    %c0_174 = arith.constant 0 : index
    %493 = vector.load %arg10[%c32_173, %c0_174] : memref<64x32xf32, #tpu.memory_space<vmem>>, vector<8x16xf32>
    tpu.vector_store %arg10[%c32_173, %c0_174], %492 {strides = array<i32>} : memref<64x32xf32, #tpu.memory_space<vmem>>, vector<8x16xf32>,
    %494 = vector.extract_strided_slice %491 {offsets = [0, 16], sizes = [8, 16], strides = [1, 1]} : vector<8x32xf32> to vector<8x16xf32>
    %c24_175 = arith.constant 24 : index
    %c16_176 = arith.constant 16 : index
    %495 = vector.load %arg10[%c24_175, %c16_176] : memref<64x32xf32, #tpu.memory_space<vmem>>, vector<8x16xf32>
    tpu.vector_store %arg10[%c24_175, %c16_176], %494 {strides = array<i32>} : memref<64x32xf32, #tpu.memory_space<vmem>>, vector<8x16xf32>,
    %496 = arith.truncf %491 : vector<8x32xf32> to vector<8x32xbf16>
    %cst_177 = arith.constant dense<0.000000e+00> : vector<8x128xf32>
    %497 = tpu.matmul %496, %318, %cst_177 {dimension_numbers = #tpu.dot_dimension_numbers<[1], [0], [0], [1], [0, 0, 1, 1], [], []>} : vector<8x32xbf16>, vector<32x128xbf16>, vector<8x128xf32> -> vector<8x128xf32>
    %c40_178 = arith.constant 40 : index
    %c0_179 = arith.constant 0 : index
    %498 = vector.load %arg9[%c40_178, %c0_179] : memref<64x128xf32, #tpu.memory_space<vmem>>, vector<8x128xf32>
    %c16_180 = arith.constant 16 : index
    %c0_181 = arith.constant 0 : index
    %499 = vector.load %arg9[%c16_180, %c0_181] : memref<64x128xf32, #tpu.memory_space<vmem>>, vector<8x128xf32>
    %500 = arith.select %18, %498, %499 : vector<8x128xi1>, vector<8x128xf32>
    %501 = arith.addf %500, %497 : vector<8x128xf32>
    %502 = vector.extract_strided_slice %501 {offsets = [0, 0], sizes = [8, 32], strides = [1, 1]} : vector<8x128xf32> to vector<8x32xf32>
    %503 = arith.negf %502 : vector<8x32xf32>
    %504 = math.exp %503 : vector<8x32xf32>
    %cst_182 = arith.constant 1.000000e+00 : f32
    %505 = vector.broadcast %cst_182 : f32 to vector<8x32xf32>
    %506 = arith.addf %505, %504 : vector<8x32xf32>
    %507 = arith.divf %505, %506 : vector<8x32xf32>
    %508 = vector.extract_strided_slice %501 {offsets = [0, 32], sizes = [8, 32], strides = [1, 1]} : vector<8x128xf32> to vector<8x32xf32>
    %509 = arith.negf %508 : vector<8x32xf32>
    %510 = math.exp %509 : vector<8x32xf32>
    %cst_183 = arith.constant 1.000000e+00 : f32
    %511 = vector.broadcast %cst_183 : f32 to vector<8x32xf32>
    %512 = arith.addf %511, %510 : vector<8x32xf32>
    %513 = arith.divf %511, %512 : vector<8x32xf32>
    %514 = vector.extract_strided_slice %501 {offsets = [0, 64], sizes = [8, 32], strides = [1, 1]} : vector<8x128xf32> to vector<8x32xf32>
    %515 = math.tanh %514 : vector<8x32xf32>
    %516 = vector.extract_strided_slice %501 {offsets = [0, 96], sizes = [8, 32], strides = [1, 1]} : vector<8x128xf32> to vector<8x32xf32>
    %517 = arith.negf %516 : vector<8x32xf32>
    %518 = math.exp %517 : vector<8x32xf32>
    %cst_184 = arith.constant 1.000000e+00 : f32
    %519 = vector.broadcast %cst_184 : f32 to vector<8x32xf32>
    %520 = arith.addf %519, %518 : vector<8x32xf32>
    %521 = arith.divf %519, %520 : vector<8x32xf32>
    %522 = arith.mulf %513, %489 : vector<8x32xf32>
    %523 = arith.mulf %507, %515 : vector<8x32xf32>
    %524 = arith.addf %522, %523 : vector<8x32xf32>
    %525 = math.tanh %524 : vector<8x32xf32>
    %526 = arith.mulf %521, %525 : vector<8x32xf32>
    %527 = vector.extract_strided_slice %526 {offsets = [0, 0], sizes = [8, 16], strides = [1, 1]} : vector<8x32xf32> to vector<8x16xf32>
    %c40_185 = arith.constant 40 : index
    %c0_186 = arith.constant 0 : index
    %528 = vector.load %arg10[%c40_185, %c0_186] : memref<64x32xf32, #tpu.memory_space<vmem>>, vector<8x16xf32>
    tpu.vector_store %arg10[%c40_185, %c0_186], %527 {strides = array<i32>} : memref<64x32xf32, #tpu.memory_space<vmem>>, vector<8x16xf32>,
    %529 = vector.extract_strided_slice %526 {offsets = [0, 16], sizes = [8, 16], strides = [1, 1]} : vector<8x32xf32> to vector<8x16xf32>
    %c16_187 = arith.constant 16 : index
    %c16_188 = arith.constant 16 : index
    %530 = vector.load %arg10[%c16_187, %c16_188] : memref<64x32xf32, #tpu.memory_space<vmem>>, vector<8x16xf32>
    tpu.vector_store %arg10[%c16_187, %c16_188], %529 {strides = array<i32>} : memref<64x32xf32, #tpu.memory_space<vmem>>, vector<8x16xf32>,
    %531 = arith.truncf %526 : vector<8x32xf32> to vector<8x32xbf16>
    %cst_189 = arith.constant dense<0.000000e+00> : vector<8x128xf32>
    %532 = tpu.matmul %531, %318, %cst_189 {dimension_numbers = #tpu.dot_dimension_numbers<[1], [0], [0], [1], [0, 0, 1, 1], [], []>} : vector<8x32xbf16>, vector<32x128xbf16>, vector<8x128xf32> -> vector<8x128xf32>
    %c48_190 = arith.constant 48 : index
    %c0_191 = arith.constant 0 : index
    %533 = vector.load %arg9[%c48_190, %c0_191] : memref<64x128xf32, #tpu.memory_space<vmem>>, vector<8x128xf32>
    %c8_192 = arith.constant 8 : index
    %c0_193 = arith.constant 0 : index
    %534 = vector.load %arg9[%c8_192, %c0_193] : memref<64x128xf32, #tpu.memory_space<vmem>>, vector<8x128xf32>
    %535 = arith.select %18, %533, %534 : vector<8x128xi1>, vector<8x128xf32>
    %536 = arith.addf %535, %532 : vector<8x128xf32>
    %537 = vector.extract_strided_slice %536 {offsets = [0, 0], sizes = [8, 32], strides = [1, 1]} : vector<8x128xf32> to vector<8x32xf32>
    %538 = arith.negf %537 : vector<8x32xf32>
    %539 = math.exp %538 : vector<8x32xf32>
    %cst_194 = arith.constant 1.000000e+00 : f32
    %540 = vector.broadcast %cst_194 : f32 to vector<8x32xf32>
    %541 = arith.addf %540, %539 : vector<8x32xf32>
    %542 = arith.divf %540, %541 : vector<8x32xf32>
    %543 = vector.extract_strided_slice %536 {offsets = [0, 32], sizes = [8, 32], strides = [1, 1]} : vector<8x128xf32> to vector<8x32xf32>
    %544 = arith.negf %543 : vector<8x32xf32>
    %545 = math.exp %544 : vector<8x32xf32>
    %cst_195 = arith.constant 1.000000e+00 : f32
    %546 = vector.broadcast %cst_195 : f32 to vector<8x32xf32>
    %547 = arith.addf %546, %545 : vector<8x32xf32>
    %548 = arith.divf %546, %547 : vector<8x32xf32>
    %549 = vector.extract_strided_slice %536 {offsets = [0, 64], sizes = [8, 32], strides = [1, 1]} : vector<8x128xf32> to vector<8x32xf32>
    %550 = math.tanh %549 : vector<8x32xf32>
    %551 = vector.extract_strided_slice %536 {offsets = [0, 96], sizes = [8, 32], strides = [1, 1]} : vector<8x128xf32> to vector<8x32xf32>
    %552 = arith.negf %551 : vector<8x32xf32>
    %553 = math.exp %552 : vector<8x32xf32>
    %cst_196 = arith.constant 1.000000e+00 : f32
    %554 = vector.broadcast %cst_196 : f32 to vector<8x32xf32>
    %555 = arith.addf %554, %553 : vector<8x32xf32>
    %556 = arith.divf %554, %555 : vector<8x32xf32>
    %557 = arith.mulf %548, %524 : vector<8x32xf32>
    %558 = arith.mulf %542, %550 : vector<8x32xf32>
    %559 = arith.addf %557, %558 : vector<8x32xf32>
    %560 = math.tanh %559 : vector<8x32xf32>
    %561 = arith.mulf %556, %560 : vector<8x32xf32>
    %562 = vector.extract_strided_slice %561 {offsets = [0, 0], sizes = [8, 16], strides = [1, 1]} : vector<8x32xf32> to vector<8x16xf32>
    %c48_197 = arith.constant 48 : index
    %c0_198 = arith.constant 0 : index
    %563 = vector.load %arg10[%c48_197, %c0_198] : memref<64x32xf32, #tpu.memory_space<vmem>>, vector<8x16xf32>
    tpu.vector_store %arg10[%c48_197, %c0_198], %562 {strides = array<i32>} : memref<64x32xf32, #tpu.memory_space<vmem>>, vector<8x16xf32>,
    %564 = vector.extract_strided_slice %561 {offsets = [0, 16], sizes = [8, 16], strides = [1, 1]} : vector<8x32xf32> to vector<8x16xf32>
    %c8_199 = arith.constant 8 : index
    %c16_200 = arith.constant 16 : index
    %565 = vector.load %arg10[%c8_199, %c16_200] : memref<64x32xf32, #tpu.memory_space<vmem>>, vector<8x16xf32>
    tpu.vector_store %arg10[%c8_199, %c16_200], %564 {strides = array<i32>} : memref<64x32xf32, #tpu.memory_space<vmem>>, vector<8x16xf32>,
    %566 = arith.truncf %561 : vector<8x32xf32> to vector<8x32xbf16>
    %cst_201 = arith.constant dense<0.000000e+00> : vector<8x128xf32>
    %567 = tpu.matmul %566, %318, %cst_201 {dimension_numbers = #tpu.dot_dimension_numbers<[1], [0], [0], [1], [0, 0, 1, 1], [], []>} : vector<8x32xbf16>, vector<32x128xbf16>, vector<8x128xf32> -> vector<8x128xf32>
    %c56_202 = arith.constant 56 : index
    %c0_203 = arith.constant 0 : index
    %568 = vector.load %arg9[%c56_202, %c0_203] : memref<64x128xf32, #tpu.memory_space<vmem>>, vector<8x128xf32>
    %c0_204 = arith.constant 0 : index
    %c0_205 = arith.constant 0 : index
    %569 = vector.load %arg9[%c0_204, %c0_205] : memref<64x128xf32, #tpu.memory_space<vmem>>, vector<8x128xf32>
    %570 = arith.select %18, %568, %569 : vector<8x128xi1>, vector<8x128xf32>
    %571 = arith.addf %570, %567 : vector<8x128xf32>
    %572 = vector.extract_strided_slice %571 {offsets = [0, 0], sizes = [8, 32], strides = [1, 1]} : vector<8x128xf32> to vector<8x32xf32>
    %573 = arith.negf %572 : vector<8x32xf32>
    %574 = math.exp %573 : vector<8x32xf32>
    %cst_206 = arith.constant 1.000000e+00 : f32
    %575 = vector.broadcast %cst_206 : f32 to vector<8x32xf32>
    %576 = arith.addf %575, %574 : vector<8x32xf32>
    %577 = arith.divf %575, %576 : vector<8x32xf32>
    %578 = vector.extract_strided_slice %571 {offsets = [0, 32], sizes = [8, 32], strides = [1, 1]} : vector<8x128xf32> to vector<8x32xf32>
    %579 = arith.negf %578 : vector<8x32xf32>
    %580 = math.exp %579 : vector<8x32xf32>
    %cst_207 = arith.constant 1.000000e+00 : f32
    %581 = vector.broadcast %cst_207 : f32 to vector<8x32xf32>
    %582 = arith.addf %581, %580 : vector<8x32xf32>
    %583 = arith.divf %581, %582 : vector<8x32xf32>
    %584 = vector.extract_strided_slice %571 {offsets = [0, 64], sizes = [8, 32], strides = [1, 1]} : vector<8x128xf32> to vector<8x32xf32>
    %585 = math.tanh %584 : vector<8x32xf32>
    %586 = vector.extract_strided_slice %571 {offsets = [0, 96], sizes = [8, 32], strides = [1, 1]} : vector<8x128xf32> to vector<8x32xf32>
    %587 = arith.negf %586 : vector<8x32xf32>
    %588 = math.exp %587 : vector<8x32xf32>
    %cst_208 = arith.constant 1.000000e+00 : f32
    %589 = vector.broadcast %cst_208 : f32 to vector<8x32xf32>
    %590 = arith.addf %589, %588 : vector<8x32xf32>
    %591 = arith.divf %589, %590 : vector<8x32xf32>
    %592 = arith.mulf %583, %559 : vector<8x32xf32>
    %593 = arith.mulf %577, %585 : vector<8x32xf32>
    %594 = arith.addf %592, %593 : vector<8x32xf32>
    %595 = math.tanh %594 : vector<8x32xf32>
    %596 = arith.mulf %591, %595 : vector<8x32xf32>
    %597 = vector.extract_strided_slice %596 {offsets = [0, 0], sizes = [8, 16], strides = [1, 1]} : vector<8x32xf32> to vector<8x16xf32>
    %c56_209 = arith.constant 56 : index
    %c0_210 = arith.constant 0 : index
    %598 = vector.load %arg10[%c56_209, %c0_210] : memref<64x32xf32, #tpu.memory_space<vmem>>, vector<8x16xf32>
    tpu.vector_store %arg10[%c56_209, %c0_210], %597 {strides = array<i32>} : memref<64x32xf32, #tpu.memory_space<vmem>>, vector<8x16xf32>,
    %599 = vector.extract_strided_slice %596 {offsets = [0, 16], sizes = [8, 16], strides = [1, 1]} : vector<8x32xf32> to vector<8x16xf32>
    %c0_211 = arith.constant 0 : index
    %c16_212 = arith.constant 16 : index
    %600 = vector.load %arg10[%c0_211, %c16_212] : memref<64x32xf32, #tpu.memory_space<vmem>>, vector<8x16xf32>
    tpu.vector_store %arg10[%c0_211, %c16_212], %599 {strides = array<i32>} : memref<64x32xf32, #tpu.memory_space<vmem>>, vector<8x16xf32>,
    %c56_213 = arith.constant 56 : index
    %c0_214 = arith.constant 0 : index
    %601 = vector.load %arg10[%c56_213, %c0_214] : memref<64x32xf32, #tpu.memory_space<vmem>>, vector<8x32xf32>
    %c0_215 = arith.constant 0 : index
    %c0_216 = arith.constant 0 : index
    %602 = vector.load %arg8[%c0_215, %c0_216] : memref<8x32xf32, #tpu.memory_space<vmem>>, vector<8x32xf32>
    tpu.vector_store %arg8[%c0_215, %c0_216], %601 {strides = array<i32>} : memref<8x32xf32, #tpu.memory_space<vmem>>, vector<8x32xf32>,
    return
  }
  func.func @transform_0(%arg0: i32) -> (i32, i32, i32) {
    %c0_i32 = arith.constant 0 : i32
    %c0_i32_0 = arith.constant 0 : i32
    %c0_i32_1 = arith.constant 0 : i32
    return %arg0, %c0_i32, %c0_i32_0 : i32, i32, i32
  }
  func.func @transform_1(%arg0: i32) -> (i32, i32) {
    %c0_i32 = arith.constant 0 : i32
    %c0_i32_0 = arith.constant 0 : i32
    %c0_i32_1 = arith.constant 0 : i32
    return %c0_i32, %c0_i32_0 : i32, i32
  }
  func.func @transform_2(%arg0: i32) -> (i32, i32) {
    %c0_i32 = arith.constant 0 : i32
    %c0_i32_0 = arith.constant 0 : i32
    %c0_i32_1 = arith.constant 0 : i32
    return %c0_i32, %c0_i32_0 : i32, i32
  }
  func.func @transform_3(%arg0: i32) -> (i32, i32) {
    %c0_i32 = arith.constant 0 : i32
    %c0_i32_0 = arith.constant 0 : i32
    %c0_i32_1 = arith.constant 0 : i32
    return %c0_i32, %c0_i32_0 : i32, i32
  }
  func.func @transform_4(%arg0: i32) -> (i32, i32) {
    %c0_i32 = arith.constant 0 : i32
    %c0_i32_0 = arith.constant 0 : i32
    %c0_i32_1 = arith.constant 0 : i32
    return %c0_i32, %c0_i32_0 : i32, i32
  }
  func.func @transform_5(%arg0: i32) -> (i32, i32) {
    %c0_i32 = arith.constant 0 : i32
    %c0_i32_0 = arith.constant 0 : i32
    %c0_i32_1 = arith.constant 0 : i32
    return %c0_i32, %c0_i32_0 : i32, i32
  }
  func.func @transform_6(%arg0: i32) -> (i32, i32) {
    %c0_i32 = arith.constant 0 : i32
    %c0_i32_0 = arith.constant 0 : i32
    %c0_i32_1 = arith.constant 0 : i32
    return %c0_i32, %c0_i32_0 : i32, i32
  }
  func.func @transform_7(%arg0: i32) -> (i32, i32) {
    %c0_i32 = arith.constant 0 : i32
    %c0_i32_0 = arith.constant 0 : i32
    return %arg0, %c0_i32 : i32, i32
  }
}

</mosaic_0001>

<llo_original>
// kernel: tpu_custom_call.1
$region0: #{tpu_custom_call.1}
  #allocation0 [shape = 'u32[]', space=smem, size = 0x4, offset = 0x4, fixed_abs, tag = 'smem constant byte address 0x4 - core index']
  #allocation1 [shape = 'u32[144,128]{1,0:T(1,128)}', space=vmem, size = 0x12000, scoped, tag = 'internal scratch']
  #allocation2 [shape = 'f32[64,128]{1,0:T(8,128)}', space=vmem, size = 0x8000, scoped, tag = 'scratch operand']
  #allocation3 [shape = 'f32[64,32]{1,0:T(8,128)}', space=vmem, size = 0x8000, scoped, tag = 'scratch operand']
  %s0 = inlined_call_operand.vmem [shape: bf16[1,64,32], index: 0, kind: input, shape index: {}]
  %s1 = inlined_call_operand.vmem [shape: bf16[32,128], index: 1, kind: input, shape index: {}]
  %s2 = inlined_call_operand.vmem [shape: f32[1,128], index: 2, kind: input, shape index: {}]
  %s3 = inlined_call_operand.vmem [shape: bf16[32,128], index: 3, kind: input, shape index: {}]
  %s4 = inlined_call_operand.vmem [shape: bf16[32,128], index: 4, kind: input, shape index: {}]
  %s5 = inlined_call_operand.vmem [shape: f32[1,128], index: 5, kind: input, shape index: {}]
  %s6 = inlined_call_operand.hbm [shape: bf16[32,128], index: 6, kind: input, shape index: {}]
  %s7 = inlined_call_operand.hbm [shape: f32[8,32], index: 7, kind: output, shape index: {}]
  %s8 = sld [smem:[#allocation0]]
  $region42: #{tpu_custom_call.1} parent=0
    _
  %s10 = ssub.s32 1, %s8
  %s11 = scalar_select 0, %s10, %s8
  $region1: #{tpu_custom_call.1} parent=0
    #allocation4 [shape = 'u8[8192]{0}', space=vmem, size = 0x2000, scoped, tag = 'input window, operand 6, single buffered']
    #allocation5 [shape = 's32[1]{0}', space=sflag, size = 0x4, scoped, tag = 'scoped memory for tpu_custom_call.1']
    #allocation6 [shape = 's32[1]{0}', space=sflag, size = 0x4, scoped, tag = 'scoped memory for tpu_custom_call.1']
    #allocation7 [shape = 'u8[4096]{0}', space=vmem, size = 0x1000, scoped, tag = 'output window, operand 0, single buffered']
    %12 = vsyncpa [#allocation5], 0
    %13 = vsyncpa [#allocation6], 0
    // Predicated region
    $region2: #{tpu_custom_call.1} parent=1 // pred_check
      _
    $region3: #{tpu_custom_call.1} parent=1 // pred_check_branch
      %15 = sbr.rel (0) target = $region5
    $region4: #{tpu_custom_call.1} parent=1 // pred_region
      _
    $region5: #{tpu_custom_call.1} parent=1 // pred_fallthru
      _
    // Predicated region
    $region6: #{tpu_custom_call.1} parent=1 // pred_check
      _
    $region7: #{tpu_custom_call.1} parent=1 // pred_check_branch
      %17 = sbr.rel (0) target = $region9
    $region8: #{tpu_custom_call.1} parent=1 // pred_region
      _
    $region9: #{tpu_custom_call.1} parent=1 // pred_fallthru
      _
    // Predicated region
    $region10: #{tpu_custom_call.1} parent=1 // pred_check
      _
    $region11: #{tpu_custom_call.1} parent=1 // pred_check_branch
      %19 = sbr.rel (0) target = $region13
    $region12: #{tpu_custom_call.1} parent=1 // pred_region
      _
    $region13: #{tpu_custom_call.1} parent=1 // pred_fallthru
      _
    // Predicated region
    $region14: #{tpu_custom_call.1} parent=1 // pred_check
      _
    $region15: #{tpu_custom_call.1} parent=1 // pred_check_branch
      %21 = sbr.rel (0) target = $region17
    $region16: #{tpu_custom_call.1} parent=1 // pred_region
      _
    $region17: #{tpu_custom_call.1} parent=1 // pred_fallthru
      _
    // Predicated region
    $region18: #{tpu_custom_call.1} parent=1 // pred_check
      _
    $region19: #{tpu_custom_call.1} parent=1 // pred_check_branch
      %23 = sbr.rel (0) target = $region21
    $region20: #{tpu_custom_call.1} parent=1 // pred_region
      _
    $region21: #{tpu_custom_call.1} parent=1 // pred_fallthru
      _
    // Predicated region
    $region22: #{tpu_custom_call.1} parent=1 // pred_check
      _
    $region23: #{tpu_custom_call.1} parent=1 // pred_check_branch
      %25 = sbr.rel (0) target = $region25
    $region24: #{tpu_custom_call.1} parent=1 // pred_region
      _
    $region25: #{tpu_custom_call.1} parent=1 // pred_fallthru
      _
    // Predicated region
    $region26: #{tpu_custom_call.1} parent=1 // pred_check
      _
    $region27: #{tpu_custom_call.1} parent=1 // pred_check_branch
      %27 = sbr.rel (0) target = $region29
    $region28: #{tpu_custom_call.1} parent=1 // pred_region
      %s29 = ssub.s32 256, 256
      %30 = vsyncadd [#allocation5], %s29
      %s31 = sshll.u32 [#allocation4], 4
      %s32 = int_to_ptr.vmem [resolvable:$true] %s31
      %37 = dma.hbm_to_vmem [thread:$0]  %s6, 256, %s32, [#allocation5], 64, 64, 4
    $region29: #{tpu_custom_call.1} parent=1 // pred_fallthru
      _
    // Predicated region
    $region30: #{tpu_custom_call.1} parent=1 // pred_check
      _
    $region31: #{tpu_custom_call.1} parent=1 // pred_check_branch
      %39 = sbr.rel (0) target = $region33
    $region32: #{tpu_custom_call.1} parent=1 // pred_region
      %40 = dma.done [#allocation5], 256
    $region33: #{tpu_custom_call.1} parent=1 // pred_fallthru
      _
    %v42 = vlaneseq
    %v43 = vand.u32 %v42, 127
    %vm44 = vcmp.lt.s32.totalorder %v43, 0
    %v45 = vsub.s32 0, %v43
    %v46 = vsel %vm44, %v45, %v43
    %v47 = vshrl.u32 %v46, 5
    %v48 = vand.u32 %v46, 31
    %v49 = vsub.s32 0, %v48
    %v50 = vsel %vm44, %v49, %v48
    %vm51 = vcmp.ne.s32.totalorder %v50, 0
    %vm52 = vcmp.lt.s32.totalorder %v50, 0
    %vm53 = vmand %vm52, %vm51
    %v54 = vadd.s32 %v50, 32
    %v55 = vsel %vm53, %v54, %v50
    %vm56 = vcmp.lt.s32.totalorder %v55, 16
    %v57 = vld [vmem:[%s0] sm:$0xf]
    %v58 = vld [vmem:[%s0 + $0x4] sm:$0xf]
    %v59 = vld [vmem:[%s0 + $0x8] sm:$0xf]
    %v60 = vld [vmem:[%s0 + $0xc] sm:$0xf]
    %v61 = vld [vmem:[%s0 + $0x10] sm:$0xf]
    %v62 = vld [vmem:[%s0 + $0x14] sm:$0xf]
    %v63 = vld [vmem:[%s0 + $0x18] sm:$0xf]
    %v64 = vld [vmem:[%s0 + $0x1c] sm:$0xf]
    %v65 = vld [vmem:[%s1] sm:$0xf]
    %v66 = vld [vmem:[%s1 + $0x4] sm:$0xf]
    %v67 = vld [vmem:[%s1 + $0x8] sm:$0xf]
    %v68 = vld [vmem:[%s1 + $0xc] sm:$0xf]
    %v69 = vld [vmem:[%s2] sm:$0x1]
    %v71 = vlaneseq
    %v72 = vshrl.u32 %v71, 7
    %v73 = vsub.s32 0, %v72
    %v74 = vrot.slane %v69, %v73
    %v84 = vunpack.c.l.b16 %v57
    %v85 = vunpack.c.l.b16 %v58
    %v86 = vunpack.c.l.b16 %v59
    %v87 = vunpack.c.l.b16 %v60
    %v88 = vunpack.c.l.b16 %v61
    %v89 = vunpack.c.l.b16 %v62
    %v90 = vunpack.c.l.b16 %v63
    %v91 = vunpack.c.l.b16 %v64
    %v92 = vpack.c.b16 %v85, %v84
    %v93 = vpack.c.b16 %v87, %v86
    %v94 = vpack.c.b16 %v89, %v88
    %v95 = vpack.c.b16 %v91, %v90
    %v100 = vunpack.c.l.b16 %v65
    %v101 = vunpack.c.l.b16 %v66
    %v102 = vunpack.c.l.b16 %v67
    %v103 = vunpack.c.l.b16 %v68
    %v104 = vpack.c.b16 %v101, %v100
    %v105 = vpack.c.b16 %v103, %v102
    %vm108 = vcmask 261120
    %v110 = vsel %vm108, %v92, 0
    %v113 = vsel %vm108, %v93, 0
    %v116 = vsel %vm108, %v94, 0
    %v119 = vsel %vm108, %v95, 0
    %121 = vmatprep.subr.bf16.mxu0 0
    %122 = vmatpush1.bf16.msra.mxu0 0
    %123 = vmatprep.subr.bf16.mxu0 0
    %124 = vmatpush1.bf16.msra.mxu0 0
    %125 = vmatprep.subr.bf16.mxu0 0
    %126 = vmatpush1.bf16.msra.mxu0 0
    %127 = vmatprep.subr.bf16.mxu0 0
    %128 = vmatpush1.bf16.msra.mxu0 0
    %129 = vmatprep.subr.bf16.mxu0 0
    %130 = vmatpush1.bf16.msra.mxu0 0
    %131 = vmatprep.subr.bf16.mxu0 0
    %132 = vmatpush1.bf16.msra.mxu0 0
    %133 = vmatprep.subr.bf16.mxu0 0
    %134 = vmatpush1.bf16.msra.mxu0 %v105
    %135 = vmatprep.subr.bf16.mxu0 0
    %136 = vmatpush1.bf16.msra.mxu0 %v104
    %137 = vmatprep.subr.bf16.mxu0 0
    %138 = vmatpush2.bf16.msra.mxu0 0
    %139 = vmatprep.subr.bf16.mxu0 0
    %140 = vmatpush2.bf16.msra.mxu0 0
    %141 = vmatprep.subr.bf16.mxu0 0
    %142 = vmatpush2.bf16.msra.mxu0 0
    %143 = vmatprep.subr.bf16.mxu0 0
    %144 = vmatpush2.bf16.msra.mxu0 0
    %145 = vmatprep.subr.bf16.mxu0 0
    %146 = vmatpush2.bf16.msra.mxu0 0
    %147 = vmatprep.subr.bf16.mxu0 0
    %148 = vmatpush2.bf16.msra.mxu0 0
    %149 = vmatprep.subr.bf16.mxu0 0
    %150 = vmatpush2.bf16.msra.mxu0 0
    %151 = vmatprep.subr.bf16.mxu0 0
    %152 = vmatpush2.bf16.msra.mxu0 0
    %153 = vmatprep.mubr.bf16.mxu0 0
    %154 = vmatmul.mubr.bf16.gmra.mxu0 %v110
    %v155 = vpop.f32.mrf.mxu0
    %v156 = vadd.f32 %v74, %v155
    %v157 = vpop.f32.mrf.mxu0
    %v158 = vpop.f32.mrf.mxu0
    %v159 = vadd.f32 %v74, %v158
    %v160 = vpop.f32.mrf.mxu0
    %161 = vmatprep.mubr.bf16.mxu0 0
    %162 = vmatmul.mubr.bf16.gmra.mxu0 %v113
    %v163 = vpop.f32.mrf.mxu0
    %v164 = vadd.f32 %v74, %v163
    %v165 = vpop.f32.mrf.mxu0
    %v166 = vpop.f32.mrf.mxu0
    %v167 = vadd.f32 %v74, %v166
    %v168 = vpop.f32.mrf.mxu0
    %169 = vmatprep.mubr.bf16.mxu0 0
    %170 = vmatmul.mubr.bf16.gmra.mxu0 %v116
    %v171 = vpop.f32.mrf.mxu0
    %v172 = vadd.f32 %v74, %v171
    %v173 = vpop.f32.mrf.mxu0
    %v174 = vpop.f32.mrf.mxu0
    %v175 = vadd.f32 %v74, %v174
    %v176 = vpop.f32.mrf.mxu0
    %177 = vmatprep.mubr.bf16.mxu0 0
    %178 = vmatmul.mubr.bf16.gmra.mxu0 %v119
    %v179 = vpop.f32.mrf.mxu0
    %v180 = vadd.f32 %v74, %v179
    %v181 = vpop.f32.mrf.mxu0
    %v182 = vpop.f32.mrf.mxu0
    %v183 = vadd.f32 %v74, %v182
    %v184 = vpop.f32.mrf.mxu0
    %185 = vdwg.mxu0
    %186 = vst [vmem:[#allocation2] sm:$0xff] %v156
    %187 = vst [vmem:[#allocation2 + $0x8] sm:$0xff] %v159
    %188 = vst [vmem:[#allocation2 + $0x10] sm:$0xff] %v164
    %189 = vst [vmem:[#allocation2 + $0x18] sm:$0xff] %v167
    %190 = vst [vmem:[#allocation2 + $0x20] sm:$0xff] %v172
    %191 = vst [vmem:[#allocation2 + $0x28] sm:$0xff] %v175
    %192 = vst [vmem:[#allocation2 + $0x30] sm:$0xff] %v180
    %193 = vst [vmem:[#allocation2 + $0x38] sm:$0xff] %v183
    %v194 = vld [vmem:[%s3] sm:$0xf]
    %v195 = vld [vmem:[%s3 + $0x4] sm:$0xf]
    %v196 = vld [vmem:[%s3 + $0x8] sm:$0xf]
    %v197 = vld [vmem:[%s3 + $0xc] sm:$0xf]
    %v202 = vunpack.c.l.b16 %v194
    %v203 = vunpack.c.l.b16 %v195
    %v204 = vunpack.c.l.b16 %v196
    %v205 = vunpack.c.l.b16 %v197
    %v206 = vpack.c.b16 %v203, %v202
    %v207 = vpack.c.b16 %v205, %v204
    %v211 = vsel %vm108, 0, 0
    %213 = vmatprep.subr.bf16.mxu0 0
    %214 = vmatpush1.bf16.msra.mxu0 0
    %215 = vmatprep.subr.bf16.mxu0 0
    %216 = vmatpush1.bf16.msra.mxu0 0
    %217 = vmatprep.subr.bf16.mxu0 0
    %218 = vmatpush1.bf16.msra.mxu0 0
    %219 = vmatprep.subr.bf16.mxu0 0
    %220 = vmatpush1.bf16.msra.mxu0 0
    %221 = vmatprep.subr.bf16.mxu0 0
    %222 = vmatpush1.bf16.msra.mxu0 0
    %223 = vmatprep.subr.bf16.mxu0 0
    %224 = vmatpush1.bf16.msra.mxu0 0
    %225 = vmatprep.subr.bf16.mxu0 0
    %226 = vmatpush1.bf16.msra.mxu0 %v207
    %227 = vmatprep.subr.bf16.mxu0 0
    %228 = vmatpush1.bf16.msra.mxu0 %v206
    %229 = vmatprep.subr.bf16.mxu0 0
    %230 = vmatpush2.bf16.msra.mxu0 0
    %231 = vmatprep.subr.bf16.mxu0 0
    %232 = vmatpush2.bf16.msra.mxu0 0
    %233 = vmatprep.subr.bf16.mxu0 0
    %234 = vmatpush2.bf16.msra.mxu0 0
    %235 = vmatprep.subr.bf16.mxu0 0
    %236 = vmatpush2.bf16.msra.mxu0 0
    %237 = vmatprep.subr.bf16.mxu0 0
    %238 = vmatpush2.bf16.msra.mxu0 0
    %239 = vmatprep.subr.bf16.mxu0 0
    %240 = vmatpush2.bf16.msra.mxu0 0
    %241 = vmatprep.subr.bf16.mxu0 0
    %242 = vmatpush2.bf16.msra.mxu0 0
    %243 = vmatprep.subr.bf16.mxu0 0
    %244 = vmatpush2.bf16.msra.mxu0 0
    %245 = vmatprep.mubr.bf16.mxu0 0
    %246 = vmatmul.mubr.bf16.gmra.mxu0 %v211
    %v247 = vpop.f32.mrf.mxu0
    %v248 = vadd.f32 0.0, %v247
    %v249 = vpop.f32.mrf.mxu0
    %v250 = vpop.f32.mrf.mxu0
    %v251 = vpop.f32.mrf.mxu0
    %252 = vdwg.mxu0
    %v253 = vld [vmem:[#allocation2] sm:$0xff]
    %v254 = vld [vmem:[#allocation2 + $0x38] sm:$0xff]
    %v255 = vsel %vm56, %v253, %v254
    %v256 = vadd.f32 %v255, %v248
    %v257 = vxor.u32 %v256, 2147483648
    %v258 = vmul.f32 %v257, 1.442695
    %v259 = vpow.pop %v258
    %v260 = vadd.f32 %v259, 1.0
    %v261 = vrcp.pop %v260
    %v262 = vmul.f32 1.0, %v261
    %v263 = vtanh.pop %v256
    %v264 = vmul.f32 %v262, 0.0
    %266 = vrot.lane.b32.xlu0 %v263, 64
    %v267 = vpop.permute.xlu0 %266
    %v269 = vmul.f32 %v262, %v267
    %271 = vrot.lane.b32.xlu0 %v269, 32
    %v272 = vpop.permute.xlu0 %271
    %v274 = vadd.f32 %v264, %v272
    %v275 = vtanh.pop %v274
    %277 = vrot.lane.b32.xlu0 %v275, 64
    %v278 = vpop.permute.xlu0 %277
    %v280 = vmul.f32 %v262, %v278
    %282 = vrot.lane.b32.xlu0 %v280, 32
    %v283 = vpop.permute.xlu0 %282
    %vm285 = vcmask 130048
    %286 = vst.msk [vmem:[#allocation3] sm:$0xff] %vm285, %v283
    %vm287 = vcmask 261248
    %288 = vst.msk [vmem:[#allocation3 + $0x38] sm:$0xff] %vm287, %v283
    %v289 = vpack.c.bf16 %v280, %v280
    %291 = vrot.lane.b32.xlu0 %v289, 32
    %v292 = vpop.permute.xlu0 %291
    %v294 = vsel %vm108, %v292, 0
    %296 = vmatprep.subr.bf16.mxu0 0
    %297 = vmatpush1.bf16.msra.mxu0 0
    %298 = vmatprep.subr.bf16.mxu0 0
    %299 = vmatpush1.bf16.msra.mxu0 0
    %300 = vmatprep.subr.bf16.mxu0 0
    %301 = vmatpush1.bf16.msra.mxu0 0
    %302 = vmatprep.subr.bf16.mxu0 0
    %303 = vmatpush1.bf16.msra.mxu0 0
    %304 = vmatprep.subr.bf16.mxu0 0
    %305 = vmatpush1.bf16.msra.mxu0 0
    %306 = vmatprep.subr.bf16.mxu0 0
    %307 = vmatpush1.bf16.msra.mxu0 0
    %308 = vmatprep.subr.bf16.mxu0 0
    %309 = vmatpush1.bf16.msra.mxu0 %v207
    %310 = vmatprep.subr.bf16.mxu0 0
    %311 = vmatpush1.bf16.msra.mxu0 %v206
    %312 = vmatprep.subr.bf16.mxu0 0
    %313 = vmatpush2.bf16.msra.mxu0 0
    %314 = vmatprep.subr.bf16.mxu0 0
    %315 = vmatpush2.bf16.msra.mxu0 0
    %316 = vmatprep.subr.bf16.mxu0 0
    %317 = vmatpush2.bf16.msra.mxu0 0
    %318 = vmatprep.subr.bf16.mxu0 0
    %319 = vmatpush2.bf16.msra.mxu0 0
    %320 = vmatprep.subr.bf16.mxu0 0
    %321 = vmatpush2.bf16.msra.mxu0 0
    %322 = vmatprep.subr.bf16.mxu0 0
    %323 = vmatpush2.bf16.msra.mxu0 0
    %324 = vmatprep.subr.bf16.mxu0 0
    %325 = vmatpush2.bf16.msra.mxu0 0
    %326 = vmatprep.subr.bf16.mxu0 0
    %327 = vmatpush2.bf16.msra.mxu0 0
    %328 = vmatprep.mubr.bf16.mxu0 0
    %329 = vmatmul.mubr.bf16.gmra.mxu0 %v294
    %v330 = vpop.f32.mrf.mxu0
    %v331 = vadd.f32 0.0, %v330
    %v332 = vpop.f32.mrf.mxu0
    %v333 = vpop.f32.mrf.mxu0
    %v334 = vpop.f32.mrf.mxu0
    %335 = vdwg.mxu0
    %v336 = vld [vmem:[#allocation2 + $0x8] sm:$0xff]
    %v337 = vld [vmem:[#allocation2 + $0x30] sm:$0xff]
    %v338 = vsel %vm56, %v336, %v337
    %v339 = vadd.f32 %v338, %v331
    %v340 = vxor.u32 %v339, 2147483648
    %v341 = vmul.f32 %v340, 1.442695
    %v342 = vpow.pop %v341
    %v343 = vadd.f32 %v342, 1.0
    %v344 = vrcp.pop %v343
    %v345 = vmul.f32 1.0, %v344
    %v346 = vtanh.pop %v339
    %v347 = vmul.f32 %v345, %v274
    %349 = vrot.lane.b32.xlu0 %v346, 64
    %v350 = vpop.permute.xlu0 %349
    %v352 = vmul.f32 %v345, %v350
    %354 = vrot.lane.b32.xlu0 %v352, 32
    %v355 = vpop.permute.xlu0 %354
    %v357 = vadd.f32 %v347, %v355
    %v358 = vtanh.pop %v357
    %360 = vrot.lane.b32.xlu0 %v358, 64
    %v361 = vpop.permute.xlu0 %360
    %v363 = vmul.f32 %v345, %v361
    %365 = vrot.lane.b32.xlu0 %v363, 32
    %v366 = vpop.permute.xlu0 %365
    %368 = vst.msk [vmem:[#allocation3 + $0x8] sm:$0xff] %vm285, %v366
    %369 = vst.msk [vmem:[#allocation3 + $0x30] sm:$0xff] %vm287, %v366
    %v370 = vpack.c.bf16 %v363, %v363
    %372 = vrot.lane.b32.xlu0 %v370, 32
    %v373 = vpop.permute.xlu0 %372
    %v375 = vsel %vm108, %v373, 0
    %377 = vmatprep.subr.bf16.mxu0 0
    %378 = vmatpush1.bf16.msra.mxu0 0
    %379 = vmatprep.subr.bf16.mxu0 0
    %380 = vmatpush1.bf16.msra.mxu0 0
    %381 = vmatprep.subr.bf16.mxu0 0
    %382 = vmatpush1.bf16.msra.mxu0 0
    %383 = vmatprep.subr.bf16.mxu0 0
    %384 = vmatpush1.bf16.msra.mxu0 0
    %385 = vmatprep.subr.bf16.mxu0 0
    %386 = vmatpush1.bf16.msra.mxu0 0
    %387 = vmatprep.subr.bf16.mxu0 0
    %388 = vmatpush1.bf16.msra.mxu0 0
    %389 = vmatprep.subr.bf16.mxu0 0
    %390 = vmatpush1.bf16.msra.mxu0 %v207
    %391 = vmatprep.subr.bf16.mxu0 0
    %392 = vmatpush1.bf16.msra.mxu0 %v206
    %393 = vmatprep.subr.bf16.mxu0 0
    %394 = vmatpush2.bf16.msra.mxu0 0
    %395 = vmatprep.subr.bf16.mxu0 0
    %396 = vmatpush2.bf16.msra.mxu0 0
    %397 = vmatprep.subr.bf16.mxu0 0
    %398 = vmatpush2.bf16.msra.mxu0 0
    %399 = vmatprep.subr.bf16.mxu0 0
    %400 = vmatpush2.bf16.msra.mxu0 0
    %401 = vmatprep.subr.bf16.mxu0 0
    %402 = vmatpush2.bf16.msra.mxu0 0
    %403 = vmatprep.subr.bf16.mxu0 0
    %404 = vmatpush2.bf16.msra.mxu0 0
    %405 = vmatprep.subr.bf16.mxu0 0
    %406 = vmatpush2.bf16.msra.mxu0 0
    %407 = vmatprep.subr.bf16.mxu0 0
    %408 = vmatpush2.bf16.msra.mxu0 0
    %409 = vmatprep.mubr.bf16.mxu0 0
    %410 = vmatmul.mubr.bf16.gmra.mxu0 %v375
    %v411 = vpop.f32.mrf.mxu0
    %v412 = vadd.f32 0.0, %v411
    %v413 = vpop.f32.mrf.mxu0
    %v414 = vpop.f32.mrf.mxu0
    %v415 = vpop.f32.mrf.mxu0
    %416 = vdwg.mxu0
    %v417 = vld [vmem:[#allocation2 + $0x10] sm:$0xff]
    %v418 = vld [vmem:[#allocation2 + $0x28] sm:$0xff]
    %v419 = vsel %vm56, %v417, %v418
    %v420 = vadd.f32 %v419, %v412
    %v421 = vxor.u32 %v420, 2147483648
    %v422 = vmul.f32 %v421, 1.442695
    %v423 = vpow.pop %v422
    %v424 = vadd.f32 %v423, 1.0
    %v425 = vrcp.pop %v424
    %v426 = vmul.f32 1.0, %v425
    %v427 = vtanh.pop %v420
    %v428 = vmul.f32 %v426, %v357
    %430 = vrot.lane.b32.xlu0 %v427, 64
    %v431 = vpop.permute.xlu0 %430
    %v433 = vmul.f32 %v426, %v431
    %435 = vrot.lane.b32.xlu0 %v433, 32
    %v436 = vpop.permute.xlu0 %435
    %v438 = vadd.f32 %v428, %v436
    %v439 = vtanh.pop %v438
    %441 = vrot.lane.b32.xlu0 %v439, 64
    %v442 = vpop.permute.xlu0 %441
    %v444 = vmul.f32 %v426, %v442
    %446 = vrot.lane.b32.xlu0 %v444, 32
    %v447 = vpop.permute.xlu0 %446
    %449 = vst.msk [vmem:[#allocation3 + $0x10] sm:$0xff] %vm285, %v447
    %450 = vst.msk [vmem:[#allocation3 + $0x28] sm:$0xff] %vm287, %v447
    %v451 = vpack.c.bf16 %v444, %v444
    %453 = vrot.lane.b32.xlu0 %v451, 32
    %v454 = vpop.permute.xlu0 %453
    %v456 = vsel %vm108, %v454, 0
    %458 = vmatprep.subr.bf16.mxu0 0
    %459 = vmatpush1.bf16.msra.mxu0 0
    %460 = vmatprep.subr.bf16.mxu0 0
    %461 = vmatpush1.bf16.msra.mxu0 0
    %462 = vmatprep.subr.bf16.mxu0 0
    %463 = vmatpush1.bf16.msra.mxu0 0
    %464 = vmatprep.subr.bf16.mxu0 0
    %465 = vmatpush1.bf16.msra.mxu0 0
    %466 = vmatprep.subr.bf16.mxu0 0
    %467 = vmatpush1.bf16.msra.mxu0 0
    %468 = vmatprep.subr.bf16.mxu0 0
    %469 = vmatpush1.bf16.msra.mxu0 0
    %470 = vmatprep.subr.bf16.mxu0 0
    %471 = vmatpush1.bf16.msra.mxu0 %v207
    %472 = vmatprep.subr.bf16.mxu0 0
    %473 = vmatpush1.bf16.msra.mxu0 %v206
    %474 = vmatprep.subr.bf16.mxu0 0
    %475 = vmatpush2.bf16.msra.mxu0 0
    %476 = vmatprep.subr.bf16.mxu0 0
    %477 = vmatpush2.bf16.msra.mxu0 0
    %478 = vmatprep.subr.bf16.mxu0 0
    %479 = vmatpush2.bf16.msra.mxu0 0
    %480 = vmatprep.subr.bf16.mxu0 0
    %481 = vmatpush2.bf16.msra.mxu0 0
    %482 = vmatprep.subr.bf16.mxu0 0
    %483 = vmatpush2.bf16.msra.mxu0 0
    %484 = vmatprep.subr.bf16.mxu0 0
    %485 = vmatpush2.bf16.msra.mxu0 0
    %486 = vmatprep.subr.bf16.mxu0 0
    %487 = vmatpush2.bf16.msra.mxu0 0
    %488 = vmatprep.subr.bf16.mxu0 0
    %489 = vmatpush2.bf16.msra.mxu0 0
    %490 = vmatprep.mubr.bf16.mxu0 0
    %491 = vmatmul.mubr.bf16.gmra.mxu0 %v456
    %v492 = vpop.f32.mrf.mxu0
    %v493 = vadd.f32 0.0, %v492
    %v494 = vpop.f32.mrf.mxu0
    %v495 = vpop.f32.mrf.mxu0
    %v496 = vpop.f32.mrf.mxu0
    %497 = vdwg.mxu0
    %v498 = vld [vmem:[#allocation2 + $0x18] sm:$0xff]
    %v499 = vld [vmem:[#allocation2 + $0x20] sm:$0xff]
    %v500 = vsel %vm56, %v498, %v499
    %v501 = vadd.f32 %v500, %v493
    %v502 = vxor.u32 %v501, 2147483648
    %v503 = vmul.f32 %v502, 1.442695
    %v504 = vpow.pop %v503
    %v505 = vadd.f32 %v504, 1.0
    %v506 = vrcp.pop %v505
    %v507 = vmul.f32 1.0, %v506
    %v508 = vtanh.pop %v501
    %v509 = vmul.f32 %v507, %v438
    %511 = vrot.lane.b32.xlu0 %v508, 64
    %v512 = vpop.permute.xlu0 %511
    %v514 = vmul.f32 %v507, %v512
    %516 = vrot.lane.b32.xlu0 %v514, 32
    %v517 = vpop.permute.xlu0 %516
    %v519 = vadd.f32 %v509, %v517
    %v520 = vtanh.pop %v519
    %522 = vrot.lane.b32.xlu0 %v520, 64
    %v523 = vpop.permute.xlu0 %522
    %v525 = vmul.f32 %v507, %v523
    %527 = vrot.lane.b32.xlu0 %v525, 32
    %v528 = vpop.permute.xlu0 %527
    %530 = vst.msk [vmem:[#allocation3 + $0x18] sm:$0xff] %vm285, %v528
    %531 = vst.msk [vmem:[#allocation3 + $0x20] sm:$0xff] %vm287, %v528
    %v532 = vpack.c.bf16 %v525, %v525
    %534 = vrot.lane.b32.xlu0 %v532, 32
    %v535 = vpop.permute.xlu0 %534
    %v537 = vsel %vm108, %v535, 0
    %539 = vmatprep.subr.bf16.mxu0 0
    %540 = vmatpush1.bf16.msra.mxu0 0
    %541 = vmatprep.subr.bf16.mxu0 0
    %542 = vmatpush1.bf16.msra.mxu0 0
    %543 = vmatprep.subr.bf16.mxu0 0
    %544 = vmatpush1.bf16.msra.mxu0 0
    %545 = vmatprep.subr.bf16.mxu0 0
    %546 = vmatpush1.bf16.msra.mxu0 0
    %547 = vmatprep.subr.bf16.mxu0 0
    %548 = vmatpush1.bf16.msra.mxu0 0
    %549 = vmatprep.subr.bf16.mxu0 0
    %550 = vmatpush1.bf16.msra.mxu0 0
    %551 = vmatprep.subr.bf16.mxu0 0
    %552 = vmatpush1.bf16.msra.mxu0 %v207
    %553 = vmatprep.subr.bf16.mxu0 0
    %554 = vmatpush1.bf16.msra.mxu0 %v206
    %555 = vmatprep.subr.bf16.mxu0 0
    %556 = vmatpush2.bf16.msra.mxu0 0
    %557 = vmatprep.subr.bf16.mxu0 0
    %558 = vmatpush2.bf16.msra.mxu0 0
    %559 = vmatprep.subr.bf16.mxu0 0
    %560 = vmatpush2.bf16.msra.mxu0 0
    %561 = vmatprep.subr.bf16.mxu0 0
    %562 = vmatpush2.bf16.msra.mxu0 0
    %563 = vmatprep.subr.bf16.mxu0 0
    %564 = vmatpush2.bf16.msra.mxu0 0
    %565 = vmatprep.subr.bf16.mxu0 0
    %566 = vmatpush2.bf16.msra.mxu0 0
    %567 = vmatprep.subr.bf16.mxu0 0
    %568 = vmatpush2.bf16.msra.mxu0 0
    %569 = vmatprep.subr.bf16.mxu0 0
    %570 = vmatpush2.bf16.msra.mxu0 0
    %571 = vmatprep.mubr.bf16.mxu0 0
    %572 = vmatmul.mubr.bf16.gmra.mxu0 %v537
    %v573 = vpop.f32.mrf.mxu0
    %v574 = vadd.f32 0.0, %v573
    %v575 = vpop.f32.mrf.mxu0
    %v576 = vpop.f32.mrf.mxu0
    %v577 = vpop.f32.mrf.mxu0
    %578 = vdwg.mxu0
    %v579 = vld [vmem:[#allocation2 + $0x20] sm:$0xff]
    %v580 = vld [vmem:[#allocation2 + $0x18] sm:$0xff]
    %v581 = vsel %vm56, %v579, %v580
    %v582 = vadd.f32 %v581, %v574
    %v583 = vxor.u32 %v582, 2147483648
    %v584 = vmul.f32 %v583, 1.442695
    %v585 = vpow.pop %v584
    %v586 = vadd.f32 %v585, 1.0
    %v587 = vrcp.pop %v586
    %v588 = vmul.f32 1.0, %v587
    %v589 = vtanh.pop %v582
    %v590 = vmul.f32 %v588, %v519
    %592 = vrot.lane.b32.xlu0 %v589, 64
    %v593 = vpop.permute.xlu0 %592
    %v595 = vmul.f32 %v588, %v593
    %597 = vrot.lane.b32.xlu0 %v595, 32
    %v598 = vpop.permute.xlu0 %597
    %v600 = vadd.f32 %v590, %v598
    %v601 = vtanh.pop %v600
    %603 = vrot.lane.b32.xlu0 %v601, 64
    %v604 = vpop.permute.xlu0 %603
    %v606 = vmul.f32 %v588, %v604
    %608 = vrot.lane.b32.xlu0 %v606, 32
    %v609 = vpop.permute.xlu0 %608
    %611 = vst.msk [vmem:[#allocation3 + $0x20] sm:$0xff] %vm285, %v609
    %612 = vst.msk [vmem:[#allocation3 + $0x18] sm:$0xff] %vm287, %v609
    %v613 = vpack.c.bf16 %v606, %v606
    %615 = vrot.lane.b32.xlu0 %v613, 32
    %v616 = vpop.permute.xlu0 %615
    %v618 = vsel %vm108, %v616, 0
    %620 = vmatprep.subr.bf16.mxu0 0
    %621 = vmatpush1.bf16.msra.mxu0 0
    %622 = vmatprep.subr.bf16.mxu0 0
    %623 = vmatpush1.bf16.msra.mxu0 0
    %624 = vmatprep.subr.bf16.mxu0 0
    %625 = vmatpush1.bf16.msra.mxu0 0
    %626 = vmatprep.subr.bf16.mxu0 0
    %627 = vmatpush1.bf16.msra.mxu0 0
    %628 = vmatprep.subr.bf16.mxu0 0
    %629 = vmatpush1.bf16.msra.mxu0 0
    %630 = vmatprep.subr.bf16.mxu0 0
    %631 = vmatpush1.bf16.msra.mxu0 0
    %632 = vmatprep.subr.bf16.mxu0 0
    %633 = vmatpush1.bf16.msra.mxu0 %v207
    %634 = vmatprep.subr.bf16.mxu0 0
    %635 = vmatpush1.bf16.msra.mxu0 %v206
    %636 = vmatprep.subr.bf16.mxu0 0
    %637 = vmatpush2.bf16.msra.mxu0 0
    %638 = vmatprep.subr.bf16.mxu0 0
    %639 = vmatpush2.bf16.msra.mxu0 0
    %640 = vmatprep.subr.bf16.mxu0 0
    %641 = vmatpush2.bf16.msra.mxu0 0
    %642 = vmatprep.subr.bf16.mxu0 0
    %643 = vmatpush2.bf16.msra.mxu0 0
    %644 = vmatprep.subr.bf16.mxu0 0
    %645 = vmatpush2.bf16.msra.mxu0 0
    %646 = vmatprep.subr.bf16.mxu0 0
    %647 = vmatpush2.bf16.msra.mxu0 0
    %648 = vmatprep.subr.bf16.mxu0 0
    %649 = vmatpush2.bf16.msra.mxu0 0
    %650 = vmatprep.subr.bf16.mxu0 0
    %651 = vmatpush2.bf16.msra.mxu0 0
    %652 = vmatprep.mubr.bf16.mxu0 0
    %653 = vmatmul.mubr.bf16.gmra.mxu0 %v618
    %v654 = vpop.f32.mrf.mxu0
    %v655 = vadd.f32 0.0, %v654
    %v656 = vpop.f32.mrf.mxu0
    %v657 = vpop.f32.mrf.mxu0
    %v658 = vpop.f32.mrf.mxu0
    %659 = vdwg.mxu0
    %v660 = vld [vmem:[#allocation2 + $0x28] sm:$0xff]
    %v661 = vld [vmem:[#allocation2 + $0x10] sm:$0xff]
    %v662 = vsel %vm56, %v660, %v661
    %v663 = vadd.f32 %v662, %v655
    %v664 = vxor.u32 %v663, 2147483648
    %v665 = vmul.f32 %v664, 1.442695
    %v666 = vpow.pop %v665
    %v667 = vadd.f32 %v666, 1.0
    %v668 = vrcp.pop %v667
    %v669 = vmul.f32 1.0, %v668
    %v670 = vtanh.pop %v663
    %v671 = vmul.f32 %v669, %v600
    %673 = vrot.lane.b32.xlu0 %v670, 64
    %v674 = vpop.permute.xlu0 %673
    %v676 = vmul.f32 %v669, %v674
    %678 = vrot.lane.b32.xlu0 %v676, 32
    %v679 = vpop.permute.xlu0 %678
    %v681 = vadd.f32 %v671, %v679
    %v682 = vtanh.pop %v681
    %684 = vrot.lane.b32.xlu0 %v682, 64
    %v685 = vpop.permute.xlu0 %684
    %v687 = vmul.f32 %v669, %v685
    %689 = vrot.lane.b32.xlu0 %v687, 32
    %v690 = vpop.permute.xlu0 %689
    %692 = vst.msk [vmem:[#allocation3 + $0x28] sm:$0xff] %vm285, %v690
    %693 = vst.msk [vmem:[#allocation3 + $0x10] sm:$0xff] %vm287, %v690
    %v694 = vpack.c.bf16 %v687, %v687
    %696 = vrot.lane.b32.xlu0 %v694, 32
    %v697 = vpop.permute.xlu0 %696
    %v699 = vsel %vm108, %v697, 0
    %701 = vmatprep.subr.bf16.mxu0 0
    %702 = vmatpush1.bf16.msra.mxu0 0
    %703 = vmatprep.subr.bf16.mxu0 0
    %704 = vmatpush1.bf16.msra.mxu0 0
    %705 = vmatprep.subr.bf16.mxu0 0
    %706 = vmatpush1.bf16.msra.mxu0 0
    %707 = vmatprep.subr.bf16.mxu0 0
    %708 = vmatpush1.bf16.msra.mxu0 0
    %709 = vmatprep.subr.bf16.mxu0 0
    %710 = vmatpush1.bf16.msra.mxu0 0
    %711 = vmatprep.subr.bf16.mxu0 0
    %712 = vmatpush1.bf16.msra.mxu0 0
    %713 = vmatprep.subr.bf16.mxu0 0
    %714 = vmatpush1.bf16.msra.mxu0 %v207
    %715 = vmatprep.subr.bf16.mxu0 0
    %716 = vmatpush1.bf16.msra.mxu0 %v206
    %717 = vmatprep.subr.bf16.mxu0 0
    %718 = vmatpush2.bf16.msra.mxu0 0
    %719 = vmatprep.subr.bf16.mxu0 0
    %720 = vmatpush2.bf16.msra.mxu0 0
    %721 = vmatprep.subr.bf16.mxu0 0
    %722 = vmatpush2.bf16.msra.mxu0 0
    %723 = vmatprep.subr.bf16.mxu0 0
    %724 = vmatpush2.bf16.msra.mxu0 0
    %725 = vmatprep.subr.bf16.mxu0 0
    %726 = vmatpush2.bf16.msra.mxu0 0
    %727 = vmatprep.subr.bf16.mxu0 0
    %728 = vmatpush2.bf16.msra.mxu0 0
    %729 = vmatprep.subr.bf16.mxu0 0
    %730 = vmatpush2.bf16.msra.mxu0 0
    %731 = vmatprep.subr.bf16.mxu0 0
    %732 = vmatpush2.bf16.msra.mxu0 0
    %733 = vmatprep.mubr.bf16.mxu0 0
    %734 = vmatmul.mubr.bf16.gmra.mxu0 %v699
    %v735 = vpop.f32.mrf.mxu0
    %v736 = vadd.f32 0.0, %v735
    %v737 = vpop.f32.mrf.mxu0
    %v738 = vpop.f32.mrf.mxu0
    %v739 = vpop.f32.mrf.mxu0
    %740 = vdwg.mxu0
    %v741 = vld [vmem:[#allocation2 + $0x30] sm:$0xff]
    %v742 = vld [vmem:[#allocation2 + $0x8] sm:$0xff]
    %v743 = vsel %vm56, %v741, %v742
    %v744 = vadd.f32 %v743, %v736
    %v745 = vxor.u32 %v744, 2147483648
    %v746 = vmul.f32 %v745, 1.442695
    %v747 = vpow.pop %v746
    %v748 = vadd.f32 %v747, 1.0
    %v749 = vrcp.pop %v748
    %v750 = vmul.f32 1.0, %v749
    %v751 = vtanh.pop %v744
    %v752 = vmul.f32 %v750, %v681
    %754 = vrot.lane.b32.xlu0 %v751, 64
    %v755 = vpop.permute.xlu0 %754
    %v757 = vmul.f32 %v750, %v755
    %759 = vrot.lane.b32.xlu0 %v757, 32
    %v760 = vpop.permute.xlu0 %759
    %v762 = vadd.f32 %v752, %v760
    %v763 = vtanh.pop %v762
    %765 = vrot.lane.b32.xlu0 %v763, 64
    %v766 = vpop.permute.xlu0 %765
    %v768 = vmul.f32 %v750, %v766
    %770 = vrot.lane.b32.xlu0 %v768, 32
    %v771 = vpop.permute.xlu0 %770
    %773 = vst.msk [vmem:[#allocation3 + $0x30] sm:$0xff] %vm285, %v771
    %774 = vst.msk [vmem:[#allocation3 + $0x8] sm:$0xff] %vm287, %v771
    %v775 = vpack.c.bf16 %v768, %v768
    %777 = vrot.lane.b32.xlu0 %v775, 32
    %v778 = vpop.permute.xlu0 %777
    %v780 = vsel %vm108, %v778, 0
    %782 = vmatprep.subr.bf16.mxu0 0
    %783 = vmatpush1.bf16.msra.mxu0 0
    %784 = vmatprep.subr.bf16.mxu0 0
    %785 = vmatpush1.bf16.msra.mxu0 0
    %786 = vmatprep.subr.bf16.mxu0 0
    %787 = vmatpush1.bf16.msra.mxu0 0
    %788 = vmatprep.subr.bf16.mxu0 0
    %789 = vmatpush1.bf16.msra.mxu0 0
    %790 = vmatprep.subr.bf16.mxu0 0
    %791 = vmatpush1.bf16.msra.mxu0 0
    %792 = vmatprep.subr.bf16.mxu0 0
    %793 = vmatpush1.bf16.msra.mxu0 0
    %794 = vmatprep.subr.bf16.mxu0 0
    %795 = vmatpush1.bf16.msra.mxu0 %v207
    %796 = vmatprep.subr.bf16.mxu0 0
    %797 = vmatpush1.bf16.msra.mxu0 %v206
    %798 = vmatprep.subr.bf16.mxu0 0
    %799 = vmatpush2.bf16.msra.mxu0 0
    %800 = vmatprep.subr.bf16.mxu0 0
    %801 = vmatpush2.bf16.msra.mxu0 0
    %802 = vmatprep.subr.bf16.mxu0 0
    %803 = vmatpush2.bf16.msra.mxu0 0
    %804 = vmatprep.subr.bf16.mxu0 0
    %805 = vmatpush2.bf16.msra.mxu0 0
    %806 = vmatprep.subr.bf16.mxu0 0
    %807 = vmatpush2.bf16.msra.mxu0 0
    %808 = vmatprep.subr.bf16.mxu0 0
    %809 = vmatpush2.bf16.msra.mxu0 0
    %810 = vmatprep.subr.bf16.mxu0 0
    %811 = vmatpush2.bf16.msra.mxu0 0
    %812 = vmatprep.subr.bf16.mxu0 0
    %813 = vmatpush2.bf16.msra.mxu0 0
    %814 = vmatprep.mubr.bf16.mxu0 0
    %815 = vmatmul.mubr.bf16.gmra.mxu0 %v780
    %v816 = vpop.f32.mrf.mxu0
    %v817 = vadd.f32 0.0, %v816
    %v818 = vpop.f32.mrf.mxu0
    %v819 = vpop.f32.mrf.mxu0
    %v820 = vpop.f32.mrf.mxu0
    %821 = vdwg.mxu0
    %v822 = vld [vmem:[#allocation2 + $0x38] sm:$0xff]
    %v823 = vld [vmem:[#allocation2] sm:$0xff]
    %v824 = vsel %vm56, %v822, %v823
    %v825 = vadd.f32 %v824, %v817
    %v826 = vxor.u32 %v825, 2147483648
    %v827 = vmul.f32 %v826, 1.442695
    %v828 = vpow.pop %v827
    %v829 = vadd.f32 %v828, 1.0
    %v830 = vrcp.pop %v829
    %v831 = vmul.f32 1.0, %v830
    %v832 = vtanh.pop %v825
    %v833 = vmul.f32 %v831, %v762
    %835 = vrot.lane.b32.xlu0 %v832, 64
    %v836 = vpop.permute.xlu0 %835
    %v838 = vmul.f32 %v831, %v836
    %840 = vrot.lane.b32.xlu0 %v838, 32
    %v841 = vpop.permute.xlu0 %840
    %v843 = vadd.f32 %v833, %v841
    %v844 = vtanh.pop %v843
    %846 = vrot.lane.b32.xlu0 %v844, 64
    %v847 = vpop.permute.xlu0 %846
    %v849 = vmul.f32 %v831, %v847
    %851 = vrot.lane.b32.xlu0 %v849, 32
    %v852 = vpop.permute.xlu0 %851
    %854 = vst.msk [vmem:[#allocation3 + $0x38] sm:$0xff] %vm285, %v852
    %855 = vst.msk [vmem:[#allocation3] sm:$0xff] %vm287, %v852
    %v856 = vld [vmem:[#allocation3] sm:$0xff]
    %v857 = vld [vmem:[#allocation3 + $0x8] sm:$0xff]
    %v858 = vld [vmem:[#allocation3 + $0x10] sm:$0xff]
    %v859 = vld [vmem:[#allocation3 + $0x18] sm:$0xff]
    %v860 = vld [vmem:[#allocation3 + $0x20] sm:$0xff]
    %v861 = vld [vmem:[#allocation3 + $0x28] sm:$0xff]
    %v862 = vld [vmem:[#allocation3 + $0x30] sm:$0xff]
    %v863 = vld [vmem:[#allocation3 + $0x38] sm:$0xff]
    %v864 = vpack.c.bf16 %v857, %v856
    %v865 = vpack.c.bf16 %v859, %v858
    %v866 = vpack.c.bf16 %v861, %v860
    %v867 = vpack.c.bf16 %v863, %v862
    %v868 = vld [vmem:[%s4] sm:$0xf]
    %v869 = vld [vmem:[%s4 + $0x4] sm:$0xf]
    %v870 = vld [vmem:[%s4 + $0x8] sm:$0xf]
    %v871 = vld [vmem:[%s4 + $0xc] sm:$0xf]
    %v872 = vld [vmem:[%s5] sm:$0x1]
    %v874 = vlaneseq
    %v875 = vshrl.u32 %v874, 7
    %v876 = vsub.s32 0, %v875
    %v877 = vrot.slane %v872, %v876
    %v883 = vunpack.c.l.b16 %v868
    %v884 = vunpack.c.l.b16 %v869
    %v885 = vunpack.c.l.b16 %v870
    %v886 = vunpack.c.l.b16 %v871
    %v887 = vpack.c.b16 %v884, %v883
    %v888 = vpack.c.b16 %v886, %v885
    %v892 = vsel %vm108, %v864, 0
    %v895 = vsel %vm108, %v865, 0
    %v898 = vsel %vm108, %v866, 0
    %v901 = vsel %vm108, %v867, 0
    %903 = vmatprep.subr.bf16.mxu0 0
    %904 = vmatpush1.bf16.msra.mxu0 0
    %905 = vmatprep.subr.bf16.mxu0 0
    %906 = vmatpush1.bf16.msra.mxu0 0
    %907 = vmatprep.subr.bf16.mxu0 0
    %908 = vmatpush1.bf16.msra.mxu0 0
    %909 = vmatprep.subr.bf16.mxu0 0
    %910 = vmatpush1.bf16.msra.mxu0 0
    %911 = vmatprep.subr.bf16.mxu0 0
    %912 = vmatpush1.bf16.msra.mxu0 0
    %913 = vmatprep.subr.bf16.mxu0 0
    %914 = vmatpush1.bf16.msra.mxu0 0
    %915 = vmatprep.subr.bf16.mxu0 0
    %916 = vmatpush1.bf16.msra.mxu0 %v888
    %917 = vmatprep.subr.bf16.mxu0 0
    %918 = vmatpush1.bf16.msra.mxu0 %v887
    %919 = vmatprep.subr.bf16.mxu0 0
    %920 = vmatpush2.bf16.msra.mxu0 0
    %921 = vmatprep.subr.bf16.mxu0 0
    %922 = vmatpush2.bf16.msra.mxu0 0
    %923 = vmatprep.subr.bf16.mxu0 0
    %924 = vmatpush2.bf16.msra.mxu0 0
    %925 = vmatprep.subr.bf16.mxu0 0
    %926 = vmatpush2.bf16.msra.mxu0 0
    %927 = vmatprep.subr.bf16.mxu0 0
    %928 = vmatpush2.bf16.msra.mxu0 0
    %929 = vmatprep.subr.bf16.mxu0 0
    %930 = vmatpush2.bf16.msra.mxu0 0
    %931 = vmatprep.subr.bf16.mxu0 0
    %932 = vmatpush2.bf16.msra.mxu0 0
    %933 = vmatprep.subr.bf16.mxu0 0
    %934 = vmatpush2.bf16.msra.mxu0 0
    %935 = vmatprep.mubr.bf16.mxu0 0
    %936 = vmatmul.mubr.bf16.gmra.mxu0 %v892
    %v937 = vpop.f32.mrf.mxu0
    %v938 = vadd.f32 %v877, %v937
    %v939 = vpop.f32.mrf.mxu0
    %v940 = vpop.f32.mrf.mxu0
    %v941 = vadd.f32 %v877, %v940
    %v942 = vpop.f32.mrf.mxu0
    %943 = vmatprep.mubr.bf16.mxu0 0
    %944 = vmatmul.mubr.bf16.gmra.mxu0 %v895
    %v945 = vpop.f32.mrf.mxu0
    %v946 = vadd.f32 %v877, %v945
    %v947 = vpop.f32.mrf.mxu0
    %v948 = vpop.f32.mrf.mxu0
    %v949 = vadd.f32 %v877, %v948
    %v950 = vpop.f32.mrf.mxu0
    %951 = vmatprep.mubr.bf16.mxu0 0
    %952 = vmatmul.mubr.bf16.gmra.mxu0 %v898
    %v953 = vpop.f32.mrf.mxu0
    %v954 = vadd.f32 %v877, %v953
    %v955 = vpop.f32.mrf.mxu0
    %v956 = vpop.f32.mrf.mxu0
    %v957 = vadd.f32 %v877, %v956
    %v958 = vpop.f32.mrf.mxu0
    %959 = vmatprep.mubr.bf16.mxu0 0
    %960 = vmatmul.mubr.bf16.gmra.mxu0 %v901
    %v961 = vpop.f32.mrf.mxu0
    %v962 = vadd.f32 %v877, %v961
    %v963 = vpop.f32.mrf.mxu0
    %v964 = vpop.f32.mrf.mxu0
    %v965 = vadd.f32 %v877, %v964
    %v966 = vpop.f32.mrf.mxu0
    %967 = vdwg.mxu0
    %968 = vst [vmem:[#allocation2] sm:$0xff] %v938
    %969 = vst [vmem:[#allocation2 + $0x8] sm:$0xff] %v941
    %970 = vst [vmem:[#allocation2 + $0x10] sm:$0xff] %v946
    %971 = vst [vmem:[#allocation2 + $0x18] sm:$0xff] %v949
    %972 = vst [vmem:[#allocation2 + $0x20] sm:$0xff] %v954
    %973 = vst [vmem:[#allocation2 + $0x28] sm:$0xff] %v957
    %974 = vst [vmem:[#allocation2 + $0x30] sm:$0xff] %v962
    %975 = vst [vmem:[#allocation2 + $0x38] sm:$0xff] %v965
    %v976 = vld [vmem:[#allocation4] sm:$0xf]
    %v977 = vld [vmem:[#allocation4 + $0x4] sm:$0xf]
    %v978 = vld [vmem:[#allocation4 + $0x8] sm:$0xf]
    %v979 = vld [vmem:[#allocation4 + $0xc] sm:$0xf]
    %v984 = vunpack.c.l.b16 %v976
    %v985 = vunpack.c.l.b16 %v977
    %v986 = vunpack.c.l.b16 %v978
    %v987 = vunpack.c.l.b16 %v979
    %v988 = vpack.c.b16 %v985, %v984
    %v989 = vpack.c.b16 %v987, %v986
    %992 = vmatprep.subr.bf16.mxu0 0
    %993 = vmatpush1.bf16.msra.mxu0 0
    %994 = vmatprep.subr.bf16.mxu0 0
    %995 = vmatpush1.bf16.msra.mxu0 0
    %996 = vmatprep.subr.bf16.mxu0 0
    %997 = vmatpush1.bf16.msra.mxu0 0
    %998 = vmatprep.subr.bf16.mxu0 0
    %999 = vmatpush1.bf16.msra.mxu0 0
    %1000 = vmatprep.subr.bf16.mxu0 0
    %1001 = vmatpush1.bf16.msra.mxu0 0
    %1002 = vmatprep.subr.bf16.mxu0 0
    %1003 = vmatpush1.bf16.msra.mxu0 0
    %1004 = vmatprep.subr.bf16.mxu0 0
    %1005 = vmatpush1.bf16.msra.mxu0 %v989
    %1006 = vmatprep.subr.bf16.mxu0 0
    %1007 = vmatpush1.bf16.msra.mxu0 %v988
    %1008 = vmatprep.subr.bf16.mxu0 0
    %1009 = vmatpush2.bf16.msra.mxu0 0
    %1010 = vmatprep.subr.bf16.mxu0 0
    %1011 = vmatpush2.bf16.msra.mxu0 0
    %1012 = vmatprep.subr.bf16.mxu0 0
    %1013 = vmatpush2.bf16.msra.mxu0 0
    %1014 = vmatprep.subr.bf16.mxu0 0
    %1015 = vmatpush2.bf16.msra.mxu0 0
    %1016 = vmatprep.subr.bf16.mxu0 0
    %1017 = vmatpush2.bf16.msra.mxu0 0
    %1018 = vmatprep.subr.bf16.mxu0 0
    %1019 = vmatpush2.bf16.msra.mxu0 0
    %1020 = vmatprep.subr.bf16.mxu0 0
    %1021 = vmatpush2.bf16.msra.mxu0 0
    %1022 = vmatprep.subr.bf16.mxu0 0
    %1023 = vmatpush2.bf16.msra.mxu0 0
    %1024 = vmatprep.mubr.bf16.mxu0 0
    %1025 = vmatmul.mubr.bf16.gmra.mxu0 %v211
    %v1026 = vpop.f32.mrf.mxu0
    %v1027 = vadd.f32 0.0, %v1026
    %v1028 = vpop.f32.mrf.mxu0
    %v1029 = vpop.f32.mrf.mxu0
    %v1030 = vpop.f32.mrf.mxu0
    %1031 = vdwg.mxu0
    %v1032 = vld [vmem:[#allocation2] sm:$0xff]
    %v1033 = vld [vmem:[#allocation2 + $0x38] sm:$0xff]
    %v1034 = vsel %vm56, %v1032, %v1033
    %v1035 = vadd.f32 %v1034, %v1027
    %v1036 = vxor.u32 %v1035, 2147483648
    %v1037 = vmul.f32 %v1036, 1.442695
    %v1038 = vpow.pop %v1037
    %v1039 = vadd.f32 %v1038, 1.0
    %v1040 = vrcp.pop %v1039
    %v1041 = vmul.f32 1.0, %v1040
    %v1042 = vtanh.pop %v1035
    %v1043 = vmul.f32 %v1041, 0.0
    %1045 = vrot.lane.b32.xlu0 %v1042, 64
    %v1046 = vpop.permute.xlu0 %1045
    %v1048 = vmul.f32 %v1041, %v1046
    %1050 = vrot.lane.b32.xlu0 %v1048, 32
    %v1051 = vpop.permute.xlu0 %1050
    %v1053 = vadd.f32 %v1043, %v1051
    %v1054 = vtanh.pop %v1053
    %1056 = vrot.lane.b32.xlu0 %v1054, 64
    %v1057 = vpop.permute.xlu0 %1056
    %v1059 = vmul.f32 %v1041, %v1057
    %1061 = vrot.lane.b32.xlu0 %v1059, 32
    %v1062 = vpop.permute.xlu0 %1061
    %1064 = vst.msk [vmem:[#allocation3] sm:$0xff] %vm285, %v1062
    %1065 = vst.msk [vmem:[#allocation3 + $0x38] sm:$0xff] %vm287, %v1062
    %v1066 = vpack.c.bf16 %v1059, %v1059
    %1068 = vrot.lane.b32.xlu0 %v1066, 32
    %v1069 = vpop.permute.xlu0 %1068
    %v1071 = vsel %vm108, %v1069, 0
    %1073 = vmatprep.subr.bf16.mxu0 0
    %1074 = vmatpush1.bf16.msra.mxu0 0
    %1075 = vmatprep.subr.bf16.mxu0 0
    %1076 = vmatpush1.bf16.msra.mxu0 0
    %1077 = vmatprep.subr.bf16.mxu0 0
    %1078 = vmatpush1.bf16.msra.mxu0 0
    %1079 = vmatprep.subr.bf16.mxu0 0
    %1080 = vmatpush1.bf16.msra.mxu0 0
    %1081 = vmatprep.subr.bf16.mxu0 0
    %1082 = vmatpush1.bf16.msra.mxu0 0
    %1083 = vmatprep.subr.bf16.mxu0 0
    %1084 = vmatpush1.bf16.msra.mxu0 0
    %1085 = vmatprep.subr.bf16.mxu0 0
    %1086 = vmatpush1.bf16.msra.mxu0 %v989
    %1087 = vmatprep.subr.bf16.mxu0 0
    %1088 = vmatpush1.bf16.msra.mxu0 %v988
    %1089 = vmatprep.subr.bf16.mxu0 0
    %1090 = vmatpush2.bf16.msra.mxu0 0
    %1091 = vmatprep.subr.bf16.mxu0 0
    %1092 = vmatpush2.bf16.msra.mxu0 0
    %1093 = vmatprep.subr.bf16.mxu0 0
    %1094 = vmatpush2.bf16.msra.mxu0 0
    %1095 = vmatprep.subr.bf16.mxu0 0
    %1096 = vmatpush2.bf16.msra.mxu0 0
    %1097 = vmatprep.subr.bf16.mxu0 0
    %1098 = vmatpush2.bf16.msra.mxu0 0
    %1099 = vmatprep.subr.bf16.mxu0 0
    %1100 = vmatpush2.bf16.msra.mxu0 0
    %1101 = vmatprep.subr.bf16.mxu0 0
    %1102 = vmatpush2.bf16.msra.mxu0 0
    %1103 = vmatprep.subr.bf16.mxu0 0
    %1104 = vmatpush2.bf16.msra.mxu0 0
    %1105 = vmatprep.mubr.bf16.mxu0 0
    %1106 = vmatmul.mubr.bf16.gmra.mxu0 %v1071
    %v1107 = vpop.f32.mrf.mxu0
    %v1108 = vadd.f32 0.0, %v1107
    %v1109 = vpop.f32.mrf.mxu0
    %v1110 = vpop.f32.mrf.mxu0
    %v1111 = vpop.f32.mrf.mxu0
    %1112 = vdwg.mxu0
    %v1113 = vld [vmem:[#allocation2 + $0x8] sm:$0xff]
    %v1114 = vld [vmem:[#allocation2 + $0x30] sm:$0xff]
    %v1115 = vsel %vm56, %v1113, %v1114
    %v1116 = vadd.f32 %v1115, %v1108
    %v1117 = vxor.u32 %v1116, 2147483648
    %v1118 = vmul.f32 %v1117, 1.442695
    %v1119 = vpow.pop %v1118
    %v1120 = vadd.f32 %v1119, 1.0
    %v1121 = vrcp.pop %v1120
    %v1122 = vmul.f32 1.0, %v1121
    %v1123 = vtanh.pop %v1116
    %v1124 = vmul.f32 %v1122, %v1053
    %1126 = vrot.lane.b32.xlu0 %v1123, 64
    %v1127 = vpop.permute.xlu0 %1126
    %v1129 = vmul.f32 %v1122, %v1127
    %1131 = vrot.lane.b32.xlu0 %v1129, 32
    %v1132 = vpop.permute.xlu0 %1131
    %v1134 = vadd.f32 %v1124, %v1132
    %v1135 = vtanh.pop %v1134
    %1137 = vrot.lane.b32.xlu0 %v1135, 64
    %v1138 = vpop.permute.xlu0 %1137
    %v1140 = vmul.f32 %v1122, %v1138
    %1142 = vrot.lane.b32.xlu0 %v1140, 32
    %v1143 = vpop.permute.xlu0 %1142
    %1145 = vst.msk [vmem:[#allocation3 + $0x8] sm:$0xff] %vm285, %v1143
    %1146 = vst.msk [vmem:[#allocation3 + $0x30] sm:$0xff] %vm287, %v1143
    %v1147 = vpack.c.bf16 %v1140, %v1140
    %1149 = vrot.lane.b32.xlu0 %v1147, 32
    %v1150 = vpop.permute.xlu0 %1149
    %v1152 = vsel %vm108, %v1150, 0
    %1154 = vmatprep.subr.bf16.mxu0 0
    %1155 = vmatpush1.bf16.msra.mxu0 0
    %1156 = vmatprep.subr.bf16.mxu0 0
    %1157 = vmatpush1.bf16.msra.mxu0 0
    %1158 = vmatprep.subr.bf16.mxu0 0
    %1159 = vmatpush1.bf16.msra.mxu0 0
    %1160 = vmatprep.subr.bf16.mxu0 0
    %1161 = vmatpush1.bf16.msra.mxu0 0
    %1162 = vmatprep.subr.bf16.mxu0 0
    %1163 = vmatpush1.bf16.msra.mxu0 0
    %1164 = vmatprep.subr.bf16.mxu0 0
    %1165 = vmatpush1.bf16.msra.mxu0 0
    %1166 = vmatprep.subr.bf16.mxu0 0
    %1167 = vmatpush1.bf16.msra.mxu0 %v989
    %1168 = vmatprep.subr.bf16.mxu0 0
    %1169 = vmatpush1.bf16.msra.mxu0 %v988
    %1170 = vmatprep.subr.bf16.mxu0 0
    %1171 = vmatpush2.bf16.msra.mxu0 0
    %1172 = vmatprep.subr.bf16.mxu0 0
    %1173 = vmatpush2.bf16.msra.mxu0 0
    %1174 = vmatprep.subr.bf16.mxu0 0
    %1175 = vmatpush2.bf16.msra.mxu0 0
    %1176 = vmatprep.subr.bf16.mxu0 0
    %1177 = vmatpush2.bf16.msra.mxu0 0
    %1178 = vmatprep.subr.bf16.mxu0 0
    %1179 = vmatpush2.bf16.msra.mxu0 0
    %1180 = vmatprep.subr.bf16.mxu0 0
    %1181 = vmatpush2.bf16.msra.mxu0 0
    %1182 = vmatprep.subr.bf16.mxu0 0
    %1183 = vmatpush2.bf16.msra.mxu0 0
    %1184 = vmatprep.subr.bf16.mxu0 0
    %1185 = vmatpush2.bf16.msra.mxu0 0
    %1186 = vmatprep.mubr.bf16.mxu0 0
    %1187 = vmatmul.mubr.bf16.gmra.mxu0 %v1152
    %v1188 = vpop.f32.mrf.mxu0
    %v1189 = vadd.f32 0.0, %v1188
    %v1190 = vpop.f32.mrf.mxu0
    %v1191 = vpop.f32.mrf.mxu0
    %v1192 = vpop.f32.mrf.mxu0
    %1193 = vdwg.mxu0
    %v1194 = vld [vmem:[#allocation2 + $0x10] sm:$0xff]
    %v1195 = vld [vmem:[#allocation2 + $0x28] sm:$0xff]
    %v1196 = vsel %vm56, %v1194, %v1195
    %v1197 = vadd.f32 %v1196, %v1189
    %v1198 = vxor.u32 %v1197, 2147483648
    %v1199 = vmul.f32 %v1198, 1.442695
    %v1200 = vpow.pop %v1199
    %v1201 = vadd.f32 %v1200, 1.0
    %v1202 = vrcp.pop %v1201
    %v1203 = vmul.f32 1.0, %v1202
    %v1204 = vtanh.pop %v1197
    %v1205 = vmul.f32 %v1203, %v1134
    %1207 = vrot.lane.b32.xlu0 %v1204, 64
    %v1208 = vpop.permute.xlu0 %1207
    %v1210 = vmul.f32 %v1203, %v1208
    %1212 = vrot.lane.b32.xlu0 %v1210, 32
    %v1213 = vpop.permute.xlu0 %1212
    %v1215 = vadd.f32 %v1205, %v1213
    %v1216 = vtanh.pop %v1215
    %1218 = vrot.lane.b32.xlu0 %v1216, 64
    %v1219 = vpop.permute.xlu0 %1218
    %v1221 = vmul.f32 %v1203, %v1219
    %1223 = vrot.lane.b32.xlu0 %v1221, 32
    %v1224 = vpop.permute.xlu0 %1223
    %1226 = vst.msk [vmem:[#allocation3 + $0x10] sm:$0xff] %vm285, %v1224
    %1227 = vst.msk [vmem:[#allocation3 + $0x28] sm:$0xff] %vm287, %v1224
    %v1228 = vpack.c.bf16 %v1221, %v1221
    %1230 = vrot.lane.b32.xlu0 %v1228, 32
    %v1231 = vpop.permute.xlu0 %1230
    %v1233 = vsel %vm108, %v1231, 0
    %1235 = vmatprep.subr.bf16.mxu0 0
    %1236 = vmatpush1.bf16.msra.mxu0 0
    %1237 = vmatprep.subr.bf16.mxu0 0
    %1238 = vmatpush1.bf16.msra.mxu0 0
    %1239 = vmatprep.subr.bf16.mxu0 0
    %1240 = vmatpush1.bf16.msra.mxu0 0
    %1241 = vmatprep.subr.bf16.mxu0 0
    %1242 = vmatpush1.bf16.msra.mxu0 0
    %1243 = vmatprep.subr.bf16.mxu0 0
    %1244 = vmatpush1.bf16.msra.mxu0 0
    %1245 = vmatprep.subr.bf16.mxu0 0
    %1246 = vmatpush1.bf16.msra.mxu0 0
    %1247 = vmatprep.subr.bf16.mxu0 0
    %1248 = vmatpush1.bf16.msra.mxu0 %v989
    %1249 = vmatprep.subr.bf16.mxu0 0
    %1250 = vmatpush1.bf16.msra.mxu0 %v988
    %1251 = vmatprep.subr.bf16.mxu0 0
    %1252 = vmatpush2.bf16.msra.mxu0 0
    %1253 = vmatprep.subr.bf16.mxu0 0
    %1254 = vmatpush2.bf16.msra.mxu0 0
    %1255 = vmatprep.subr.bf16.mxu0 0
    %1256 = vmatpush2.bf16.msra.mxu0 0
    %1257 = vmatprep.subr.bf16.mxu0 0
    %1258 = vmatpush2.bf16.msra.mxu0 0
    %1259 = vmatprep.subr.bf16.mxu0 0
    %1260 = vmatpush2.bf16.msra.mxu0 0
    %1261 = vmatprep.subr.bf16.mxu0 0
    %1262 = vmatpush2.bf16.msra.mxu0 0
    %1263 = vmatprep.subr.bf16.mxu0 0
    %1264 = vmatpush2.bf16.msra.mxu0 0
    %1265 = vmatprep.subr.bf16.mxu0 0
    %1266 = vmatpush2.bf16.msra.mxu0 0
    %1267 = vmatprep.mubr.bf16.mxu0 0
    %1268 = vmatmul.mubr.bf16.gmra.mxu0 %v1233
    %v1269 = vpop.f32.mrf.mxu0
    %v1270 = vadd.f32 0.0, %v1269
    %v1271 = vpop.f32.mrf.mxu0
    %v1272 = vpop.f32.mrf.mxu0
    %v1273 = vpop.f32.mrf.mxu0
    %1274 = vdwg.mxu0
    %v1275 = vld [vmem:[#allocation2 + $0x18] sm:$0xff]
    %v1276 = vld [vmem:[#allocation2 + $0x20] sm:$0xff]
    %v1277 = vsel %vm56, %v1275, %v1276
    %v1278 = vadd.f32 %v1277, %v1270
    %v1279 = vxor.u32 %v1278, 2147483648
    %v1280 = vmul.f32 %v1279, 1.442695
    %v1281 = vpow.pop %v1280
    %v1282 = vadd.f32 %v1281, 1.0
    %v1283 = vrcp.pop %v1282
    %v1284 = vmul.f32 1.0, %v1283
    %v1285 = vtanh.pop %v1278
    %v1286 = vmul.f32 %v1284, %v1215
    %1288 = vrot.lane.b32.xlu0 %v1285, 64
    %v1289 = vpop.permute.xlu0 %1288
    %v1291 = vmul.f32 %v1284, %v1289
    %1293 = vrot.lane.b32.xlu0 %v1291, 32
    %v1294 = vpop.permute.xlu0 %1293
    %v1296 = vadd.f32 %v1286, %v1294
    %v1297 = vtanh.pop %v1296
    %1299 = vrot.lane.b32.xlu0 %v1297, 64
    %v1300 = vpop.permute.xlu0 %1299
    %v1302 = vmul.f32 %v1284, %v1300
    %1304 = vrot.lane.b32.xlu0 %v1302, 32
    %v1305 = vpop.permute.xlu0 %1304
    %1307 = vst.msk [vmem:[#allocation3 + $0x18] sm:$0xff] %vm285, %v1305
    %1308 = vst.msk [vmem:[#allocation3 + $0x20] sm:$0xff] %vm287, %v1305
    %v1309 = vpack.c.bf16 %v1302, %v1302
    %1311 = vrot.lane.b32.xlu0 %v1309, 32
    %v1312 = vpop.permute.xlu0 %1311
    %v1314 = vsel %vm108, %v1312, 0
    %1316 = vmatprep.subr.bf16.mxu0 0
    %1317 = vmatpush1.bf16.msra.mxu0 0
    %1318 = vmatprep.subr.bf16.mxu0 0
    %1319 = vmatpush1.bf16.msra.mxu0 0
    %1320 = vmatprep.subr.bf16.mxu0 0
    %1321 = vmatpush1.bf16.msra.mxu0 0
    %1322 = vmatprep.subr.bf16.mxu0 0
    %1323 = vmatpush1.bf16.msra.mxu0 0
    %1324 = vmatprep.subr.bf16.mxu0 0
    %1325 = vmatpush1.bf16.msra.mxu0 0
    %1326 = vmatprep.subr.bf16.mxu0 0
    %1327 = vmatpush1.bf16.msra.mxu0 0
    %1328 = vmatprep.subr.bf16.mxu0 0
    %1329 = vmatpush1.bf16.msra.mxu0 %v989
    %1330 = vmatprep.subr.bf16.mxu0 0
    %1331 = vmatpush1.bf16.msra.mxu0 %v988
    %1332 = vmatprep.subr.bf16.mxu0 0
    %1333 = vmatpush2.bf16.msra.mxu0 0
    %1334 = vmatprep.subr.bf16.mxu0 0
    %1335 = vmatpush2.bf16.msra.mxu0 0
    %1336 = vmatprep.subr.bf16.mxu0 0
    %1337 = vmatpush2.bf16.msra.mxu0 0
    %1338 = vmatprep.subr.bf16.mxu0 0
    %1339 = vmatpush2.bf16.msra.mxu0 0
    %1340 = vmatprep.subr.bf16.mxu0 0
    %1341 = vmatpush2.bf16.msra.mxu0 0
    %1342 = vmatprep.subr.bf16.mxu0 0
    %1343 = vmatpush2.bf16.msra.mxu0 0
    %1344 = vmatprep.subr.bf16.mxu0 0
    %1345 = vmatpush2.bf16.msra.mxu0 0
    %1346 = vmatprep.subr.bf16.mxu0 0
    %1347 = vmatpush2.bf16.msra.mxu0 0
    %1348 = vmatprep.mubr.bf16.mxu0 0
    %1349 = vmatmul.mubr.bf16.gmra.mxu0 %v1314
    %v1350 = vpop.f32.mrf.mxu0
    %v1351 = vadd.f32 0.0, %v1350
    %v1352 = vpop.f32.mrf.mxu0
    %v1353 = vpop.f32.mrf.mxu0
    %v1354 = vpop.f32.mrf.mxu0
    %1355 = vdwg.mxu0
    %v1356 = vld [vmem:[#allocation2 + $0x20] sm:$0xff]
    %v1357 = vld [vmem:[#allocation2 + $0x18] sm:$0xff]
    %v1358 = vsel %vm56, %v1356, %v1357
    %v1359 = vadd.f32 %v1358, %v1351
    %v1360 = vxor.u32 %v1359, 2147483648
    %v1361 = vmul.f32 %v1360, 1.442695
    %v1362 = vpow.pop %v1361
    %v1363 = vadd.f32 %v1362, 1.0
    %v1364 = vrcp.pop %v1363
    %v1365 = vmul.f32 1.0, %v1364
    %v1366 = vtanh.pop %v1359
    %v1367 = vmul.f32 %v1365, %v1296
    %1369 = vrot.lane.b32.xlu0 %v1366, 64
    %v1370 = vpop.permute.xlu0 %1369
    %v1372 = vmul.f32 %v1365, %v1370
    %1374 = vrot.lane.b32.xlu0 %v1372, 32
    %v1375 = vpop.permute.xlu0 %1374
    %v1377 = vadd.f32 %v1367, %v1375
    %v1378 = vtanh.pop %v1377
    %1380 = vrot.lane.b32.xlu0 %v1378, 64
    %v1381 = vpop.permute.xlu0 %1380
    %v1383 = vmul.f32 %v1365, %v1381
    %1385 = vrot.lane.b32.xlu0 %v1383, 32
    %v1386 = vpop.permute.xlu0 %1385
    %1388 = vst.msk [vmem:[#allocation3 + $0x20] sm:$0xff] %vm285, %v1386
    %1389 = vst.msk [vmem:[#allocation3 + $0x18] sm:$0xff] %vm287, %v1386
    %v1390 = vpack.c.bf16 %v1383, %v1383
    %1392 = vrot.lane.b32.xlu0 %v1390, 32
    %v1393 = vpop.permute.xlu0 %1392
    %v1395 = vsel %vm108, %v1393, 0
    %1397 = vmatprep.subr.bf16.mxu0 0
    %1398 = vmatpush1.bf16.msra.mxu0 0
    %1399 = vmatprep.subr.bf16.mxu0 0
    %1400 = vmatpush1.bf16.msra.mxu0 0
    %1401 = vmatprep.subr.bf16.mxu0 0
    %1402 = vmatpush1.bf16.msra.mxu0 0
    %1403 = vmatprep.subr.bf16.mxu0 0
    %1404 = vmatpush1.bf16.msra.mxu0 0
    %1405 = vmatprep.subr.bf16.mxu0 0
    %1406 = vmatpush1.bf16.msra.mxu0 0
    %1407 = vmatprep.subr.bf16.mxu0 0
    %1408 = vmatpush1.bf16.msra.mxu0 0
    %1409 = vmatprep.subr.bf16.mxu0 0
    %1410 = vmatpush1.bf16.msra.mxu0 %v989
    %1411 = vmatprep.subr.bf16.mxu0 0
    %1412 = vmatpush1.bf16.msra.mxu0 %v988
    %1413 = vmatprep.subr.bf16.mxu0 0
    %1414 = vmatpush2.bf16.msra.mxu0 0
    %1415 = vmatprep.subr.bf16.mxu0 0
    %1416 = vmatpush2.bf16.msra.mxu0 0
    %1417 = vmatprep.subr.bf16.mxu0 0
    %1418 = vmatpush2.bf16.msra.mxu0 0
    %1419 = vmatprep.subr.bf16.mxu0 0
    %1420 = vmatpush2.bf16.msra.mxu0 0
    %1421 = vmatprep.subr.bf16.mxu0 0
    %1422 = vmatpush2.bf16.msra.mxu0 0
    %1423 = vmatprep.subr.bf16.mxu0 0
    %1424 = vmatpush2.bf16.msra.mxu0 0
    %1425 = vmatprep.subr.bf16.mxu0 0
    %1426 = vmatpush2.bf16.msra.mxu0 0
    %1427 = vmatprep.subr.bf16.mxu0 0
    %1428 = vmatpush2.bf16.msra.mxu0 0
    %1429 = vmatprep.mubr.bf16.mxu0 0
    %1430 = vmatmul.mubr.bf16.gmra.mxu0 %v1395
    %v1431 = vpop.f32.mrf.mxu0
    %v1432 = vadd.f32 0.0, %v1431
    %v1433 = vpop.f32.mrf.mxu0
    %v1434 = vpop.f32.mrf.mxu0
    %v1435 = vpop.f32.mrf.mxu0
    %1436 = vdwg.mxu0
    %v1437 = vld [vmem:[#allocation2 + $0x28] sm:$0xff]
    %v1438 = vld [vmem:[#allocation2 + $0x10] sm:$0xff]
    %v1439 = vsel %vm56, %v1437, %v1438
    %v1440 = vadd.f32 %v1439, %v1432
    %v1441 = vxor.u32 %v1440, 2147483648
    %v1442 = vmul.f32 %v1441, 1.442695
    %v1443 = vpow.pop %v1442
    %v1444 = vadd.f32 %v1443, 1.0
    %v1445 = vrcp.pop %v1444
    %v1446 = vmul.f32 1.0, %v1445
    %v1447 = vtanh.pop %v1440
    %v1448 = vmul.f32 %v1446, %v1377
    %1450 = vrot.lane.b32.xlu0 %v1447, 64
    %v1451 = vpop.permute.xlu0 %1450
    %v1453 = vmul.f32 %v1446, %v1451
    %1455 = vrot.lane.b32.xlu0 %v1453, 32
    %v1456 = vpop.permute.xlu0 %1455
    %v1458 = vadd.f32 %v1448, %v1456
    %v1459 = vtanh.pop %v1458
    %1461 = vrot.lane.b32.xlu0 %v1459, 64
    %v1462 = vpop.permute.xlu0 %1461
    %v1464 = vmul.f32 %v1446, %v1462
    %1466 = vrot.lane.b32.xlu0 %v1464, 32
    %v1467 = vpop.permute.xlu0 %1466
    %1469 = vst.msk [vmem:[#allocation3 + $0x28] sm:$0xff] %vm285, %v1467
    %1470 = vst.msk [vmem:[#allocation3 + $0x10] sm:$0xff] %vm287, %v1467
    %v1471 = vpack.c.bf16 %v1464, %v1464
    %1473 = vrot.lane.b32.xlu0 %v1471, 32
    %v1474 = vpop.permute.xlu0 %1473
    %v1476 = vsel %vm108, %v1474, 0
    %1478 = vmatprep.subr.bf16.mxu0 0
    %1479 = vmatpush1.bf16.msra.mxu0 0
    %1480 = vmatprep.subr.bf16.mxu0 0
    %1481 = vmatpush1.bf16.msra.mxu0 0
    %1482 = vmatprep.subr.bf16.mxu0 0
    %1483 = vmatpush1.bf16.msra.mxu0 0
    %1484 = vmatprep.subr.bf16.mxu0 0
    %1485 = vmatpush1.bf16.msra.mxu0 0
    %1486 = vmatprep.subr.bf16.mxu0 0
    %1487 = vmatpush1.bf16.msra.mxu0 0
    %1488 = vmatprep.subr.bf16.mxu0 0
    %1489 = vmatpush1.bf16.msra.mxu0 0
    %1490 = vmatprep.subr.bf16.mxu0 0
    %1491 = vmatpush1.bf16.msra.mxu0 %v989
    %1492 = vmatprep.subr.bf16.mxu0 0
    %1493 = vmatpush1.bf16.msra.mxu0 %v988
    %1494 = vmatprep.subr.bf16.mxu0 0
    %1495 = vmatpush2.bf16.msra.mxu0 0
    %1496 = vmatprep.subr.bf16.mxu0 0
    %1497 = vmatpush2.bf16.msra.mxu0 0
    %1498 = vmatprep.subr.bf16.mxu0 0
    %1499 = vmatpush2.bf16.msra.mxu0 0
    %1500 = vmatprep.subr.bf16.mxu0 0
    %1501 = vmatpush2.bf16.msra.mxu0 0
    %1502 = vmatprep.subr.bf16.mxu0 0
    %1503 = vmatpush2.bf16.msra.mxu0 0
    %1504 = vmatprep.subr.bf16.mxu0 0
    %1505 = vmatpush2.bf16.msra.mxu0 0
    %1506 = vmatprep.subr.bf16.mxu0 0
    %1507 = vmatpush2.bf16.msra.mxu0 0
    %1508 = vmatprep.subr.bf16.mxu0 0
    %1509 = vmatpush2.bf16.msra.mxu0 0
    %1510 = vmatprep.mubr.bf16.mxu0 0
    %1511 = vmatmul.mubr.bf16.gmra.mxu0 %v1476
    %v1512 = vpop.f32.mrf.mxu0
    %v1513 = vadd.f32 0.0, %v1512
    %v1514 = vpop.f32.mrf.mxu0
    %v1515 = vpop.f32.mrf.mxu0
    %v1516 = vpop.f32.mrf.mxu0
    %1517 = vdwg.mxu0
    %v1518 = vld [vmem:[#allocation2 + $0x30] sm:$0xff]
    %v1519 = vld [vmem:[#allocation2 + $0x8] sm:$0xff]
    %v1520 = vsel %vm56, %v1518, %v1519
    %v1521 = vadd.f32 %v1520, %v1513
    %v1522 = vxor.u32 %v1521, 2147483648
    %v1523 = vmul.f32 %v1522, 1.442695
    %v1524 = vpow.pop %v1523
    %v1525 = vadd.f32 %v1524, 1.0
    %v1526 = vrcp.pop %v1525
    %v1527 = vmul.f32 1.0, %v1526
    %v1528 = vtanh.pop %v1521
    %v1529 = vmul.f32 %v1527, %v1458
    %1531 = vrot.lane.b32.xlu0 %v1528, 64
    %v1532 = vpop.permute.xlu0 %1531
    %v1534 = vmul.f32 %v1527, %v1532
    %1536 = vrot.lane.b32.xlu0 %v1534, 32
    %v1537 = vpop.permute.xlu0 %1536
    %v1539 = vadd.f32 %v1529, %v1537
    %v1540 = vtanh.pop %v1539
    %1542 = vrot.lane.b32.xlu0 %v1540, 64
    %v1543 = vpop.permute.xlu0 %1542
    %v1545 = vmul.f32 %v1527, %v1543
    %1547 = vrot.lane.b32.xlu0 %v1545, 32
    %v1548 = vpop.permute.xlu0 %1547
    %1550 = vst.msk [vmem:[#allocation3 + $0x30] sm:$0xff] %vm285, %v1548
    %1551 = vst.msk [vmem:[#allocation3 + $0x8] sm:$0xff] %vm287, %v1548
    %v1552 = vpack.c.bf16 %v1545, %v1545
    %1554 = vrot.lane.b32.xlu0 %v1552, 32
    %v1555 = vpop.permute.xlu0 %1554
    %v1557 = vsel %vm108, %v1555, 0
    %1559 = vmatprep.subr.bf16.mxu0 0
    %1560 = vmatpush1.bf16.msra.mxu0 0
    %1561 = vmatprep.subr.bf16.mxu0 0
    %1562 = vmatpush1.bf16.msra.mxu0 0
    %1563 = vmatprep.subr.bf16.mxu0 0
    %1564 = vmatpush1.bf16.msra.mxu0 0
    %1565 = vmatprep.subr.bf16.mxu0 0
    %1566 = vmatpush1.bf16.msra.mxu0 0
    %1567 = vmatprep.subr.bf16.mxu0 0
    %1568 = vmatpush1.bf16.msra.mxu0 0
    %1569 = vmatprep.subr.bf16.mxu0 0
    %1570 = vmatpush1.bf16.msra.mxu0 0
    %1571 = vmatprep.subr.bf16.mxu0 0
    %1572 = vmatpush1.bf16.msra.mxu0 %v989
    %1573 = vmatprep.subr.bf16.mxu0 0
    %1574 = vmatpush1.bf16.msra.mxu0 %v988
    %1575 = vmatprep.subr.bf16.mxu0 0
    %1576 = vmatpush2.bf16.msra.mxu0 0
    %1577 = vmatprep.subr.bf16.mxu0 0
    %1578 = vmatpush2.bf16.msra.mxu0 0
    %1579 = vmatprep.subr.bf16.mxu0 0
    %1580 = vmatpush2.bf16.msra.mxu0 0
    %1581 = vmatprep.subr.bf16.mxu0 0
    %1582 = vmatpush2.bf16.msra.mxu0 0
    %1583 = vmatprep.subr.bf16.mxu0 0
    %1584 = vmatpush2.bf16.msra.mxu0 0
    %1585 = vmatprep.subr.bf16.mxu0 0
    %1586 = vmatpush2.bf16.msra.mxu0 0
    %1587 = vmatprep.subr.bf16.mxu0 0
    %1588 = vmatpush2.bf16.msra.mxu0 0
    %1589 = vmatprep.subr.bf16.mxu0 0
    %1590 = vmatpush2.bf16.msra.mxu0 0
    %1591 = vmatprep.mubr.bf16.mxu0 0
    %1592 = vmatmul.mubr.bf16.gmra.mxu0 %v1557
    %v1593 = vpop.f32.mrf.mxu0
    %v1594 = vadd.f32 0.0, %v1593
    %v1595 = vpop.f32.mrf.mxu0
    %v1596 = vpop.f32.mrf.mxu0
    %v1597 = vpop.f32.mrf.mxu0
    %1598 = vdwg.mxu0
    %v1599 = vld [vmem:[#allocation2 + $0x38] sm:$0xff]
    %v1600 = vld [vmem:[#allocation2] sm:$0xff]
    %v1601 = vsel %vm56, %v1599, %v1600
    %v1602 = vadd.f32 %v1601, %v1594
    %v1603 = vxor.u32 %v1602, 2147483648
    %v1604 = vmul.f32 %v1603, 1.442695
    %v1605 = vpow.pop %v1604
    %v1606 = vadd.f32 %v1605, 1.0
    %v1607 = vrcp.pop %v1606
    %v1608 = vmul.f32 1.0, %v1607
    %v1609 = vtanh.pop %v1602
    %v1610 = vmul.f32 %v1608, %v1539
    %1612 = vrot.lane.b32.xlu0 %v1609, 64
    %v1613 = vpop.permute.xlu0 %1612
    %v1615 = vmul.f32 %v1608, %v1613
    %1617 = vrot.lane.b32.xlu0 %v1615, 32
    %v1618 = vpop.permute.xlu0 %1617
    %v1620 = vadd.f32 %v1610, %v1618
    %v1621 = vtanh.pop %v1620
    %1623 = vrot.lane.b32.xlu0 %v1621, 64
    %v1624 = vpop.permute.xlu0 %1623
    %v1626 = vmul.f32 %v1608, %v1624
    %1628 = vrot.lane.b32.xlu0 %v1626, 32
    %v1629 = vpop.permute.xlu0 %1628
    %1631 = vst.msk [vmem:[#allocation3 + $0x38] sm:$0xff] %vm285, %v1629
    %1632 = vst.msk [vmem:[#allocation3] sm:$0xff] %vm287, %v1629
    %v1633 = vld [vmem:[#allocation3 + $0x38] sm:$0xff]
    %1634 = vst.msk [vmem:[#allocation7] sm:$0xff] %vm108, %v1633
    // Predicated region
    $region34: #{tpu_custom_call.1} parent=1 // pred_check
      _
    $region35: #{tpu_custom_call.1} parent=1 // pred_check_branch
      %1636 = sbr.rel (0) target = $region37
    $region36: #{tpu_custom_call.1} parent=1 // pred_region
      %s1638 = ssub.s32 128, 128
      %1639 = vsyncadd [#allocation6], %s1638
      %s1641 = sshll.u32 [#allocation7], 4
      %s1642 = int_to_ptr.vmem [resolvable:$true] %s1641
      %1644 = dma.vmem_to_hbm [thread:$0]  %s1642, 128, %s7, [#allocation6]
    $region37: #{tpu_custom_call.1} parent=1 // pred_fallthru
      _
    // Predicated region
    $region38: #{tpu_custom_call.1} parent=1 // pred_check
      _
    $region39: #{tpu_custom_call.1} parent=1 // pred_check_branch
      %1646 = sbr.rel (0) target = $region41
    $region40: #{tpu_custom_call.1} parent=1 // pred_region
      %1647 = dma.done [#allocation6], 128
    $region41: #{tpu_custom_call.1} parent=1 // pred_fallthru
      _
    %1648 = vsyncpa [#allocation5], 1
    %1649 = vsyncpa [#allocation6], 1

</llo_original>
